<compile_context>
chip_gen: v6e
topology: v6e:2x2x1
jax: 0.10.0
libtpu: 0.0.40
codegen_flags: <defaults>
</compile_context>

<pallas_src>
import jax
import jax.numpy as jnp
from jax.experimental import pallas as pl
from jax.experimental.pallas import tpu as pltpu

# ---------------- static configuration (small synthetic shapes) ----------------
N = 2048                             # number of (x_i, y_i) pairs (lane axis)
N_STEPS = 2                          # >=2 keeps both v7x TensorCores busy
N_CONT = 3                           # continuous features
EMBEDDING_SIZES = [(5, 2), (7, 3)]   # (nb_category, rank) per categorical column
N_CAT = len(EMBEDDING_SIZES)
MAXCAT = 8                           # pad category covariance matrices to 8x8
TABLE = MAXCAT * MAXCAT              # 64 flat entries per categorical column
KDIM = N_CAT * TABLE                 # combined one-hot depth (128) -> MXU K dim
N_FEAT = N_CONT + N_CAT              # combinator in_features (cont first, then cat)
FRACTION_DIAGONAL = 0.9

assert all(nb <= MAXCAT for nb, _ in EMBEDDING_SIZES), "category count exceeds MAXCAT pad"


# ----------------------------- Pallas kernel -----------------------------------
def wpk_kernel(coef_ref, xc_ref, yc_ref, xk_ref, yk_ref, table_ref, out_ref):
    tn = xc_ref.shape[1]                              # lanes in this block (static)

    # Continuous part, unrolled with SMEM scalar coefficients:
    #   acc = -sum_j coef_j * (xc_j - yc_j)^2,  coef_j = softplus(w_j) / (2 bw_j^2)
    d = xc_ref[0:1, :] - yc_ref[0:1, :]               # (1, TN) f32
    acc = d * d * (-coef_ref[0])
    for j in range(1, N_CONT):
        d = xc_ref[j:j + 1, :] - yc_ref[j:j + 1, :]
        acc = acc - d * d * coef_ref[j]

    # Categorical part: fused one-hot over both columns, then a single MXU
    # contraction against the pre-logged, weight-scaled flat table.
    #   flat_i = x_i * MAXCAT + y_i  in [0, 64);  combined row index = i*64 + flat_i
    flat = xk_ref[...] * MAXCAT + yk_ref[...]         # (N_CAT, TN) int32
    kiota = jax.lax.broadcasted_iota(jnp.int32, (KDIM, tn), 0)
    hit = kiota == flat[0:1, :]                       # column 0 lives in rows [0, 64)
    for i in range(1, N_CAT):
        hit = hit | (kiota == (i * TABLE + flat[i:i + 1, :]))
    onehot = hit.astype(jnp.float32)                  # (KDIM, TN), dense vregs
    cat = jnp.dot(table_ref[...], onehot,
                  preferred_element_type=jnp.float32)  # (8, TN); row 0 is the real one
    acc = acc + cat[0:1, :]

    out_ref[...] = jnp.exp(acc)                       # (1, TN), lane-dense store


def weighted_product_kernel(x_cont, y_cont, x_cat, y_cat, bandwidth, cat_cov_mats, w_raw):
    """x_cont/y_cont: (N, N_CONT) f32; x_cat/y_cat: (N, N_CAT) int32.
    Returns (N,) f32 covariance per pair."""
    n = x_cont.shape[0]
    assert n % (N_STEPS * 128) == 0, "batch must be a multiple of N_STEPS * 128"
    tn = n // N_STEPS

    # ---- hoisted, grid-invariant parameter math (tiny XLA ops) ----
    w = jax.nn.softplus(w_raw)[0]                                       # (N_FEAT,)
    coef = (w[:N_CONT] / (2.0 * bandwidth[0] * bandwidth[0])).astype(jnp.float32)  # (N_CONT,)

    # pre-logged, weight-scaled, flattened category covariance tables; padded
    # (never-indexed) entries contribute 0 instead of log(0) = -inf.
    valid = cat_cov_mats > 0.0
    logc = jnp.where(valid, jnp.log(jnp.maximum(cat_cov_mats, 1e-30)), 0.0)
    logc = logc * w[N_CONT:].reshape(N_CAT, 1, 1)
    table_row = logc.reshape(KDIM).astype(jnp.float32)                  # (128,)
    # MXU-friendly (8, K) LHS: row 0 carries the table, rows 1..7 are zero.
    table = jnp.zeros((8, KDIM), jnp.float32).at[0].set(table_row)

    # ---- lane-major layout: batch on the lane axis (layout plumbing only) ----
    xc = x_cont.T.astype(jnp.float32)     # (N_CONT, N)
    yc = y_cont.T.astype(jnp.float32)
    xk = x_cat.T.astype(jnp.int32)        # (N_CAT, N)
    yk = y_cat.T.astype(jnp.int32)

    out = pl.pallas_call(
        wpk_kernel,
        out_shape=jax.ShapeDtypeStruct((1, n), jnp.float32),
        grid=(N_STEPS,),
        in_specs=[
            pl.BlockSpec(memory_space=pltpu.MemorySpace.SMEM),   # coef scalars
            pl.BlockSpec((N_CONT, tn), lambda i: (0, i)),        # x_cont (T)
            pl.BlockSpec((N_CONT, tn), lambda i: (0, i)),        # y_cont (T)
            pl.BlockSpec((N_CAT, tn), lambda i: (0, i)),         # x_cat (T)
            pl.BlockSpec((N_CAT, tn), lambda i: (0, i)),         # y_cat (T)
            pl.BlockSpec((8, KDIM), lambda i: (0, 0)),           # weighted log-cov table
        ],
        out_specs=pl.BlockSpec((1, tn), lambda i: (0, i)),
        compiler_params=pltpu.CompilerParams(
            dimension_semantics=("parallel",),
            vmem_limit_bytes=32 * 1024 * 1024),
    )(coef, xc, yc, xk, yk, table)
    return out[0]


# ---------------------- deterministic parameter setup (glue) -------------------
def init_params(key, train_cont):
    n_train = train_cont.shape[0]
    # Silverman's rule of thumb; torch.std is unbiased (ddof=1)
    bandwidth = 0.9 * jnp.std(train_cont, axis=0, ddof=1) * (n_train ** (-0.2))
    bandwidth = bandwidth.reshape(1, N_CONT).astype(jnp.float32)

    # IndexKernelSingle params -> precompute full category covariance matrices
    mats = []
    for nb_cat, rank in EMBEDDING_SIZES:
        sqrt_cf = jnp.sqrt((1.0 - FRACTION_DIAGONAL) / jnp.sqrt(float(rank))) * jnp.ones(
            (nb_cat, rank), jnp.float32)
        std = FRACTION_DIAGONAL * jnp.ones((nb_cat,), jnp.float32)
        cf = sqrt_cf * sqrt_cf
        cov = cf @ cf.T + jnp.diag(std * std)
        cov = jnp.pad(cov, ((0, MAXCAT - nb_cat), (0, MAXCAT - nb_cat)))
        mats.append(cov)
    cat_cov_mats = jnp.stack(mats, axis=0).astype(jnp.float32)  # (N_CAT, MAXCAT, MAXCAT)

    # PositiveMultiply: nn.Linear(N_FEAT, 1, bias=False)-style weight (1, N_FEAT)
    bound = 1.0 / (N_FEAT ** 0.5)
    w_raw = jax.random.uniform(key, (1, N_FEAT), jnp.float32, -bound, bound)
    return bandwidth, cat_cov_mats, w_raw


# ------------------------------ pure-JAX reference ------------------------------
def reference(x_cont, y_cont, x_cat, y_cat, bandwidth, cat_cov_mats, w_raw):
    gauss = jnp.exp(-(x_cont - y_cont) ** 2 / (2.0 * bandwidth * bandwidth))
    cat_covs = [cat_cov_mats[i][x_cat[:, i], y_cat[:, i]] for i in range(N_CAT)]
    covs = jnp.concatenate([gauss, jnp.stack(cat_covs, axis=-1)], axis=-1)
    w = jax.nn.softplus(w_raw)                           # (1, N_FEAT)
    # elementwise weighted log-sum (avoids low-precision MXU pass in the ref)
    return jnp.exp(jnp.sum(jnp.log(covs) * w, axis=-1))


# ------------------------------------- main -------------------------------------
if __name__ == "__main__":
    key = jax.random.PRNGKey(0)
    k_train, k_xc, k_yc, k_xk, k_yk, k_w = jax.random.split(key, 6)

    train_cont = jax.random.normal(k_train, (32, N_CONT), jnp.float32)
    x_cont = jax.random.normal(k_xc, (N, N_CONT), jnp.float32)
    y_cont = jax.random.normal(k_yc, (N, N_CONT), jnp.float32)
    x_cat = jnp.stack(
        [jax.random.randint(jax.random.fold_in(k_xk, i), (N,), 0, nb)
         for i, (nb, _) in enumerate(EMBEDDING_SIZES)], axis=-1).astype(jnp.int32)
    y_cat = jnp.stack(
        [jax.random.randint(jax.random.fold_in(k_yk, i), (N,), 0, nb)
         for i, (nb, _) in enumerate(EMBEDDING_SIZES)], axis=-1).astype(jnp.int32)

    bandwidth, cat_cov_mats, w_raw = init_params(k_w, train_cont)

    out = weighted_product_kernel(x_cont, y_cont, x_cat, y_cat,
                                  bandwidth, cat_cov_mats, w_raw)
    out = jax.block_until_ready(out)

    ref = reference(x_cont, y_cont, x_cat, y_cat, bandwidth, cat_cov_mats, w_raw)
    assert out.shape == (N,)
    assert jnp.allclose(out, ref, rtol=1e-3, atol=1e-5), (out, ref)
    print("KERNEL_OK")
</pallas_src>

<mosaic_0001>
module attributes {stable_mosaic.version = 11 : i64} {
  func.func @wpk_kernel(%arg0: i32, %arg1: memref<3xf32, #tpu.memory_space<smem>>, %arg2: memref<3x1024xf32, #tpu.memory_space<vmem>>, %arg3: memref<3x1024xf32, #tpu.memory_space<vmem>>, %arg4: memref<2x1024xi32, #tpu.memory_space<vmem>>, %arg5: memref<2x1024xi32, #tpu.memory_space<vmem>>, %arg6: memref<8x128xf32, #tpu.memory_space<vmem>>, %arg7: memref<1x1024xf32, #tpu.memory_space<vmem>>) attributes {dimension_semantics = [#tpu.dimension_semantics<parallel>], iteration_bounds = array<i64: 2>, scalar_prefetch = 0 : i64, scratch_operands = 0 : i64, tpu.core_type = #tpu.core_type<tc>, window_params = [{transform_indices = @transform_0, window_bounds = array<i64: 3>}, {transform_indices = @transform_1, window_bounds = array<i64: 3, 1024>}, {transform_indices = @transform_2, window_bounds = array<i64: 3, 1024>}, {transform_indices = @transform_3, window_bounds = array<i64: 2, 1024>}, {transform_indices = @transform_4, window_bounds = array<i64: 2, 1024>}, {pipeline_mode = #tpu.pipeline_mode<synchronous>, transform_indices = @transform_5, window_bounds = array<i64: 8, 128>}, {transform_indices = @transform_6, window_bounds = array<i64: 1, 1024>}]} {
    %c0 = arith.constant 0 : index
    %c0_0 = arith.constant 0 : index
    %0 = vector.load %arg2[%c0, %c0_0] : memref<3x1024xf32, #tpu.memory_space<vmem>>, vector<1x1024xf32>
    %c0_1 = arith.constant 0 : index
    %c0_2 = arith.constant 0 : index
    %1 = vector.load %arg3[%c0_1, %c0_2] : memref<3x1024xf32, #tpu.memory_space<vmem>>, vector<1x1024xf32>
    %2 = arith.subf %0, %1 : vector<1x1024xf32>
    %3 = arith.mulf %2, %2 : vector<1x1024xf32>
    %c0_3 = arith.constant 0 : index
    %4 = memref.load %arg1[%c0_3] : memref<3xf32, #tpu.memory_space<smem>>
    %cst = arith.constant 0.000000e+00 : f32
    %5 = arith.subf %cst, %4 : f32
    %6 = vector.broadcast %5 : f32 to vector<1x1024xf32>
    %7 = arith.mulf %3, %6 : vector<1x1024xf32>
    %c1 = arith.constant 1 : index
    %c0_4 = arith.constant 0 : index
    %8 = vector.load %arg2[%c1, %c0_4] : memref<3x1024xf32, #tpu.memory_space<vmem>>, vector<1x1024xf32>
    %c1_5 = arith.constant 1 : index
    %c0_6 = arith.constant 0 : index
    %9 = vector.load %arg3[%c1_5, %c0_6] : memref<3x1024xf32, #tpu.memory_space<vmem>>, vector<1x1024xf32>
    %10 = arith.subf %8, %9 : vector<1x1024xf32>
    %11 = arith.mulf %10, %10 : vector<1x1024xf32>
    %c1_7 = arith.constant 1 : index
    %12 = memref.load %arg1[%c1_7] : memref<3xf32, #tpu.memory_space<smem>>
    %13 = vector.broadcast %12 : f32 to vector<1x1024xf32>
    %14 = arith.mulf %11, %13 : vector<1x1024xf32>
    %15 = arith.subf %7, %14 : vector<1x1024xf32>
    %c2 = arith.constant 2 : index
    %c0_8 = arith.constant 0 : index
    %16 = vector.load %arg2[%c2, %c0_8] : memref<3x1024xf32, #tpu.memory_space<vmem>>, vector<1x1024xf32>
    %c2_9 = arith.constant 2 : index
    %c0_10 = arith.constant 0 : index
    %17 = vector.load %arg3[%c2_9, %c0_10] : memref<3x1024xf32, #tpu.memory_space<vmem>>, vector<1x1024xf32>
    %18 = arith.subf %16, %17 : vector<1x1024xf32>
    %19 = arith.mulf %18, %18 : vector<1x1024xf32>
    %c2_11 = arith.constant 2 : index
    %20 = memref.load %arg1[%c2_11] : memref<3xf32, #tpu.memory_space<smem>>
    %21 = vector.broadcast %20 : f32 to vector<1x1024xf32>
    %22 = arith.mulf %19, %21 : vector<1x1024xf32>
    %23 = arith.subf %15, %22 : vector<1x1024xf32>
    %c0_12 = arith.constant 0 : index
    %c0_13 = arith.constant 0 : index
    %24 = vector.load %arg4[%c0_12, %c0_13] : memref<2x1024xi32, #tpu.memory_space<vmem>>, vector<2x1024xi32>
    %c8_i32 = arith.constant 8 : i32
    %25 = vector.broadcast %c8_i32 : i32 to vector<2x1024xi32>
    %26 = arith.muli %24, %25 : vector<2x1024xi32>
    %c0_14 = arith.constant 0 : index
    %c0_15 = arith.constant 0 : index
    %27 = vector.load %arg5[%c0_14, %c0_15] : memref<2x1024xi32, #tpu.memory_space<vmem>>, vector<2x1024xi32>
    %28 = arith.addi %26, %27 : vector<2x1024xi32>
    %29 = tpu.iota {dimensions = array<i32: 0>} : vector<128x1024xi32>
    %30 = vector.extract_strided_slice %28 {offsets = [0, 0], sizes = [1, 1024], strides = [1, 1]} : vector<2x1024xi32> to vector<1x1024xi32>
    %31 = vector.broadcast %30 : vector<1x1024xi32> to vector<128x1024xi32>
    %32 = arith.cmpi eq, %29, %31 : vector<128x1024xi32>
    %33 = vector.extract_strided_slice %28 {offsets = [1, 0], sizes = [1, 1024], strides = [1, 1]} : vector<2x1024xi32> to vector<1x1024xi32>
    %c64_i32 = arith.constant 64 : i32
    %34 = vector.broadcast %c64_i32 : i32 to vector<1x1024xi32>
    %35 = arith.addi %34, %33 : vector<1x1024xi32>
    %36 = vector.broadcast %35 : vector<1x1024xi32> to vector<128x1024xi32>
    %37 = arith.cmpi eq, %29, %36 : vector<128x1024xi32>
    %38 = arith.ori %32, %37 : vector<128x1024xi1>
    %39 = arith.extui %38 : vector<128x1024xi1> to vector<128x1024xi32>
    %40 = arith.sitofp %39 : vector<128x1024xi32> to vector<128x1024xf32>
    %c0_16 = arith.constant 0 : index
    %c0_17 = arith.constant 0 : index
    %41 = vector.load %arg6[%c0_16, %c0_17] : memref<8x128xf32, #tpu.memory_space<vmem>>, vector<8x128xf32>
    %cst_18 = arith.constant dense<0.000000e+00> : vector<8x1024xf32>
    %42 = tpu.matmul %41, %40, %cst_18 {dimension_numbers = #tpu.dot_dimension_numbers<[1], [0], [0], [1], [0, 0, 1, 1], [], []>} : vector<8x128xf32>, vector<128x1024xf32>, vector<8x1024xf32> -> vector<8x1024xf32>
    %43 = vector.extract_strided_slice %42 {offsets = [0, 0], sizes = [1, 1024], strides = [1, 1]} : vector<8x1024xf32> to vector<1x1024xf32>
    %44 = arith.addf %23, %43 : vector<1x1024xf32>
    %45 = math.exp %44 : vector<1x1024xf32>
    %c0_19 = arith.constant 0 : index
    %c0_20 = arith.constant 0 : index
    %46 = vector.load %arg7[%c0_19, %c0_20] : memref<1x1024xf32, #tpu.memory_space<vmem>>, vector<1x1024xf32>
    tpu.vector_store %arg7[%c0_19, %c0_20], %45 {strides = array<i32>} : memref<1x1024xf32, #tpu.memory_space<vmem>>, vector<1x1024xf32>,
    return
  }
  func.func @transform_0(%arg0: i32) -> i32 {
    %c0_i32 = arith.constant 0 : i32
    %c0_i32_0 = arith.constant 0 : i32
    return %c0_i32 : i32
  }
  func.func @transform_1(%arg0: i32) -> (i32, i32) {
    %c0_i32 = arith.constant 0 : i32
    %c0_i32_0 = arith.constant 0 : i32
    return %c0_i32, %arg0 : i32, i32
  }
  func.func @transform_2(%arg0: i32) -> (i32, i32) {
    %c0_i32 = arith.constant 0 : i32
    %c0_i32_0 = arith.constant 0 : i32
    return %c0_i32, %arg0 : i32, i32
  }
  func.func @transform_3(%arg0: i32) -> (i32, i32) {
    %c0_i32 = arith.constant 0 : i32
    %c0_i32_0 = arith.constant 0 : i32
    return %c0_i32, %arg0 : i32, i32
  }
  func.func @transform_4(%arg0: i32) -> (i32, i32) {
    %c0_i32 = arith.constant 0 : i32
    %c0_i32_0 = arith.constant 0 : i32
    return %c0_i32, %arg0 : i32, i32
  }
  func.func @transform_5(%arg0: i32) -> (i32, i32) {
    %c0_i32 = arith.constant 0 : i32
    %c0_i32_0 = arith.constant 0 : i32
    %c0_i32_1 = arith.constant 0 : i32
    return %c0_i32, %c0_i32_0 : i32, i32
  }
  func.func @transform_6(%arg0: i32) -> (i32, i32) {
    %c0_i32 = arith.constant 0 : i32
    %c0_i32_0 = arith.constant 0 : i32
    return %c0_i32, %arg0 : i32, i32
  }
}

</mosaic_0001>

<llo_original>
// kernel: tpu_custom_call.1
$region0: #{tpu_custom_call.1}
  #allocation0 [shape = 'u32[]', space=smem, size = 0x4, offset = 0x4, fixed_abs, tag = 'smem constant byte address 0x4 - core index']
  #allocation1 [shape = 'u32[144,128]{1,0:T(1,128)}', space=vmem, size = 0x12000, scoped, tag = 'internal scratch']
  %s0 = inlined_call_operand.hbm [shape: f32[3], index: 0, kind: input, shape index: {}]
  %s1 = inlined_call_operand.hbm [shape: f32[3,2048], index: 1, kind: input, shape index: {}]
  %s2 = inlined_call_operand.hbm [shape: f32[3,2048], index: 2, kind: input, shape index: {}]
  %s3 = inlined_call_operand.hbm [shape: s32[2,2048], index: 3, kind: input, shape index: {}]
  %s4 = inlined_call_operand.hbm [shape: s32[2,2048], index: 4, kind: input, shape index: {}]
  %s5 = inlined_call_operand.vmem [shape: f32[8,128], index: 5, kind: input, shape index: {}]
  %s6 = inlined_call_operand.hbm [shape: f32[1,2048], index: 6, kind: output, shape index: {}]
  %s7 = sld [smem:[#allocation0]]
  $region77: #{tpu_custom_call.1} parent=0
    _
  %s9 = ssub.s32 1, %s7
  %s10 = scalar_select 0, %s9, %s7
  $region1: #{tpu_custom_call.1} parent=0
    #allocation2 [shape = 'u8[512]{0}', space=smem, size = 0x200, scoped, tag = 'input window, operand 0, single buffered']
    #allocation3 [shape = 's32[2]{0}', space=sflag, size = 0x8, scoped, tag = 'scoped memory for tpu_custom_call.1']
    #allocation4 [shape = 's32[2]{0}', space=sflag, size = 0x8, scoped, tag = 'scoped memory for tpu_custom_call.1']
    #allocation5 [shape = 's32[2]{0}', space=sflag, size = 0x8, scoped, tag = 'scoped memory for tpu_custom_call.1']
    #allocation6 [shape = 'u8[32768]{0}', space=vmem, size = 0x8000, scoped, tag = 'input window, operand 1']
    #allocation7 [shape = 'u8[32768]{0}', space=vmem, size = 0x8000, scoped, tag = 'input window, operand 2']
    #allocation8 [shape = 's32[2]{0}', space=sflag, size = 0x8, scoped, tag = 'scoped memory for tpu_custom_call.1']
    #allocation9 [shape = 'u8[16384]{0}', space=vmem, size = 0x4000, scoped, tag = 'input window, operand 3']
    #allocation10 [shape = 'u8[16384]{0}', space=vmem, size = 0x4000, scoped, tag = 'input window, operand 4']
    #allocation11 [shape = 's32[2]{0}', space=sflag, size = 0x8, scoped, tag = 'scoped memory for tpu_custom_call.1']
    #allocation12 [shape = 'u8[8192]{0}', space=vmem, size = 0x2000, scoped, tag = 'output window, operand 0']
    %11 = vsyncpa [#allocation5], 0
    %12 = vsyncpa [#allocation3], 0
    %s13 = scalar_lea.sflag [#allocation3], 1
    %14 = vsyncpa %s13, 0
    %15 = vsyncpa [#allocation8], 0
    %s16 = scalar_lea.sflag [#allocation8], 1
    %17 = vsyncpa %s16, 0
    %18 = vsyncpa [#allocation11], 0
    %s19 = scalar_lea.sflag [#allocation11], 1
    %20 = vsyncpa %s19, 0
    %21 = vsyncpa [#allocation4], 0
    %s22 = scalar_lea.sflag [#allocation4], 1
    %23 = vsyncpa %s22, 0
    loop: start=0, step=1, limit=4
    $region2: #{tpu_custom_call.1} parent=1 // loop_pre_header
      _
    $region3: #{tpu_custom_call.1} parent=1 // loop_header
      %s25 = sphi 0, %s29
      %p26 = scmp.ge.s32.totalorder %s25, 4
      %s33 = sphi 0, %s33
      %s35 = sphi 0, %s33
      %s36 = sphi 0, %s35
      %s50 = sphi 0, %s36
      %s56 = sphi 0, %s58
      %s59 = sphi 0, %s56
      %s60 = sphi 0, %s59
      %s76 = sphi 0, %s60
      %s82 = sphi 0, %s84
      %s85 = sphi 0, %s82
      %s86 = sphi 0, %s85
      %s102 = sphi 0, %s86
      %s108 = sphi 0, %s110
      %s111 = sphi 0, %s108
      %s112 = sphi 0, %s111
      %s128 = sphi 0, %s112
      %s134 = sphi 0, %s136
      %s137 = sphi 0, %s134
      %s138 = sphi 0, %s137
      %s154 = sphi 0, %s138
      %s158 = sphi 0, %s158
      %s160 = sphi 0, %s158
      %s161 = sphi 0, %s160
      %s175 = sphi 0, %s161
      %s181 = sphi 0, %s183
      %s184 = sphi 0, %s181
      %s185 = sphi 0, %s184
      %s201 = sphi 0, %s185
    $region4: #{tpu_custom_call.1} parent=1 // loop_header_branch
      %28 = sbr.rel (%p26) target = $region8
    $region5: #{tpu_custom_call.1} parent=1 // loop_body
      %s30 = ssub.s32 %s25, 1
      %s31 = ssub.s32 %s25, 2
      %s32 = sadd.s32 %s25, 1
      %s34 = sadd.s32 %s33, 1
      %p37 = scmp.eq.s32.totalorder %s25, 1
      %p38 = scmp.ne.s32.totalorder %s33, %s35
      %p39 = scmp.eq.s32.totalorder %s25, 0
      %p40 = por %p38, %p39
      %p41 = scmp.ne.s32.totalorder %s33, %s35
      %p42 = scmp.eq.s32.totalorder %s30, 1
      %p43 = por %p41, %p42
      %p44 = scmp.ne.s32.totalorder %s35, %s36
      %p45 = scmp.eq.s32.totalorder %s30, 0
      %p46 = por %p44, %p45
      %p47 = scmp.ne.s32.totalorder %s35, %s36
      %p48 = scmp.eq.s32.totalorder %s31, 1
      %p49 = por %p47, %p48
      %p51 = scmp.ne.s32.totalorder %s36, %s50
      %p52 = scmp.eq.s32.totalorder %s31, 0
      %p53 = por %p51, %p52
      %s54 = ssub.s32 %s25, %s32
      %p55 = scmp.eq.s32.totalorder %s54, 0
      %s57 = sadd.s32 %s56, 1
      %s58 = scalar_select %p55, %s56, %s57
      %p61 = pneg %p55
      %p62 = scmp.eq.s32.totalorder %s25, 1
      %p63 = por %p61, %p62
      %p64 = scmp.ne.s32.totalorder %s56, %s59
      %p65 = scmp.eq.s32.totalorder %s25, 0
      %p66 = por %p64, %p65
      %p67 = scmp.ne.s32.totalorder %s56, %s59
      %p68 = scmp.eq.s32.totalorder %s30, 1
      %p69 = por %p67, %p68
      %p70 = scmp.ne.s32.totalorder %s59, %s60
      %p71 = scmp.eq.s32.totalorder %s30, 0
      %p72 = por %p70, %p71
      %p73 = scmp.ne.s32.totalorder %s59, %s60
      %p74 = scmp.eq.s32.totalorder %s31, 1
      %p75 = por %p73, %p74
      %p77 = scmp.ne.s32.totalorder %s60, %s76
      %p78 = scmp.eq.s32.totalorder %s31, 0
      %p79 = por %p77, %p78
      %s80 = ssub.s32 %s25, %s32
      %p81 = scmp.eq.s32.totalorder %s80, 0
      %s83 = sadd.s32 %s82, 1
      %s84 = scalar_select %p81, %s82, %s83
      %p87 = pneg %p81
      %p88 = scmp.eq.s32.totalorder %s25, 1
      %p89 = por %p87, %p88
      %p90 = scmp.ne.s32.totalorder %s82, %s85
      %p91 = scmp.eq.s32.totalorder %s25, 0
      %p92 = por %p90, %p91
      %p93 = scmp.ne.s32.totalorder %s82, %s85
      %p94 = scmp.eq.s32.totalorder %s30, 1
      %p95 = por %p93, %p94
      %p96 = scmp.ne.s32.totalorder %s85, %s86
      %p97 = scmp.eq.s32.totalorder %s30, 0
      %p98 = por %p96, %p97
      %p99 = scmp.ne.s32.totalorder %s85, %s86
      %p100 = scmp.eq.s32.totalorder %s31, 1
      %p101 = por %p99, %p100
      %p103 = scmp.ne.s32.totalorder %s86, %s102
      %p104 = scmp.eq.s32.totalorder %s31, 0
      %p105 = por %p103, %p104
      %s106 = ssub.s32 %s25, %s32
      %p107 = scmp.eq.s32.totalorder %s106, 0
      %s109 = sadd.s32 %s108, 1
      %s110 = scalar_select %p107, %s108, %s109
      %p113 = pneg %p107
      %p114 = scmp.eq.s32.totalorder %s25, 1
      %p115 = por %p113, %p114
      %p116 = scmp.ne.s32.totalorder %s108, %s111
      %p117 = scmp.eq.s32.totalorder %s25, 0
      %p118 = por %p116, %p117
      %p119 = scmp.ne.s32.totalorder %s108, %s111
      %p120 = scmp.eq.s32.totalorder %s30, 1
      %p121 = por %p119, %p120
      %p122 = scmp.ne.s32.totalorder %s111, %s112
      %p123 = scmp.eq.s32.totalorder %s30, 0
      %p124 = por %p122, %p123
      %p125 = scmp.ne.s32.totalorder %s111, %s112
      %p126 = scmp.eq.s32.totalorder %s31, 1
      %p127 = por %p125, %p126
      %p129 = scmp.ne.s32.totalorder %s112, %s128
      %p130 = scmp.eq.s32.totalorder %s31, 0
      %p131 = por %p129, %p130
      %s132 = ssub.s32 %s25, %s32
      %p133 = scmp.eq.s32.totalorder %s132, 0
      %s135 = sadd.s32 %s134, 1
      %s136 = scalar_select %p133, %s134, %s135
      %p139 = pneg %p133
      %p140 = scmp.eq.s32.totalorder %s25, 1
      %p141 = por %p139, %p140
      %p142 = scmp.ne.s32.totalorder %s134, %s137
      %p143 = scmp.eq.s32.totalorder %s25, 0
      %p144 = por %p142, %p143
      %p145 = scmp.ne.s32.totalorder %s134, %s137
      %p146 = scmp.eq.s32.totalorder %s30, 1
      %p147 = por %p145, %p146
      %p148 = scmp.ne.s32.totalorder %s137, %s138
      %p149 = scmp.eq.s32.totalorder %s30, 0
      %p150 = por %p148, %p149
      %p151 = scmp.ne.s32.totalorder %s137, %s138
      %p152 = scmp.eq.s32.totalorder %s31, 1
      %p153 = por %p151, %p152
      %p155 = scmp.ne.s32.totalorder %s138, %s154
      %p156 = scmp.eq.s32.totalorder %s31, 0
      %p157 = por %p155, %p156
      %s159 = sadd.s32 %s158, 1
      %p162 = scmp.eq.s32.totalorder %s25, 1
      %p163 = scmp.ne.s32.totalorder %s158, %s160
      %p164 = scmp.eq.s32.totalorder %s25, 0
      %p165 = por %p163, %p164
      %p166 = scmp.ne.s32.totalorder %s158, %s160
      %p167 = scmp.eq.s32.totalorder %s30, 1
      %p168 = por %p166, %p167
      %p169 = scmp.ne.s32.totalorder %s160, %s161
      %p170 = scmp.eq.s32.totalorder %s30, 0
      %p171 = por %p169, %p170
      %p172 = scmp.ne.s32.totalorder %s160, %s161
      %p173 = scmp.eq.s32.totalorder %s31, 1
      %p174 = por %p172, %p173
      %p176 = scmp.ne.s32.totalorder %s161, %s175
      %p177 = scmp.eq.s32.totalorder %s31, 0
      %p178 = por %p176, %p177
      %s179 = ssub.s32 %s25, %s32
      %p180 = scmp.eq.s32.totalorder %s179, 0
      %s182 = sadd.s32 %s181, 1
      %s183 = scalar_select %p180, %s181, %s182
      %p186 = pneg %p180
      %p187 = scmp.eq.s32.totalorder %s25, 1
      %p188 = por %p186, %p187
      %p189 = scmp.ne.s32.totalorder %s181, %s184
      %p190 = scmp.eq.s32.totalorder %s25, 0
      %p191 = por %p189, %p190
      %p192 = scmp.ne.s32.totalorder %s181, %s184
      %p193 = scmp.eq.s32.totalorder %s30, 1
      %p194 = por %p192, %p193
      %p195 = scmp.ne.s32.totalorder %s184, %s185
      %p196 = scmp.eq.s32.totalorder %s30, 0
      %p197 = por %p195, %p196
      %p198 = scmp.ne.s32.totalorder %s184, %s185
      %p199 = scmp.eq.s32.totalorder %s31, 1
      %p200 = por %p198, %p199
      %p202 = scmp.ne.s32.totalorder %s185, %s201
      %p203 = scmp.eq.s32.totalorder %s31, 0
      %p204 = por %p202, %p203
      %p205 = scmp.le.s32.totalorder 1, %s25
      %p206 = scmp.lt.s32.totalorder %s25, 3
      %p207 = pnand %p205, %p206
      %p208 = pneg %p207
      // Predicated region
      $region9: #{tpu_custom_call.1} parent=5 // pred_check
        _
      $region10: #{tpu_custom_call.1} parent=5 // pred_check_branch
        %210 = sbr.rel (%p207) target = $region12
      $region11: #{tpu_custom_call.1} parent=5 // pred_region
        %s211 = ssub.s32 %s25, 1
        // Predicated region
        $region13: #{tpu_custom_call.1} parent=11 // pred_check
          %p212 = pneg %p46
        $region14: #{tpu_custom_call.1} parent=11 // pred_check_branch
          %214 = sbr.rel (%p212) target = $region16
        $region15: #{tpu_custom_call.1} parent=11 // pred_region
          %s216 = ssub.s32 16, 16
          %217 = vsyncadd [#allocation5], %s216
          %220 = dma.hbm_to_smem %s0, 16, [#allocation2], [#allocation5]
        $region16: #{tpu_custom_call.1} parent=11 // pred_fallthru
          _
        // Predicated region
        $region17: #{tpu_custom_call.1} parent=11 // pred_check
          %p221 = pneg %p171
        $region18: #{tpu_custom_call.1} parent=11 // pred_check_branch
          %223 = sbr.rel (%p221) target = $region20
        $region19: #{tpu_custom_call.1} parent=11 // pred_region
          _
        $region20: #{tpu_custom_call.1} parent=11 // pred_fallthru
          _
      $region12: #{tpu_custom_call.1} parent=5 // pred_fallthru
        _
      %p224 = scmp.lt.s32.totalorder %s25, 2
      // Predicated region
      $region21: #{tpu_custom_call.1} parent=5 // pred_check
        %p225 = pneg %p224
      $region22: #{tpu_custom_call.1} parent=5 // pred_check_branch
        %227 = sbr.rel (%p225) target = $region24
      $region23: #{tpu_custom_call.1} parent=5 // pred_region
        // Predicated region
        $region25: #{tpu_custom_call.1} parent=23 // pred_check
          %p228 = pneg %p66
        $region26: #{tpu_custom_call.1} parent=23 // pred_check_branch
          %230 = sbr.rel (%p228) target = $region28
        $region27: #{tpu_custom_call.1} parent=23 // pred_region
          %s231 = sand.u32 %s56, 1
          %s232 = scalar_lea.sflag [#allocation3], %s231
          %s233 = sand.u32 %s56, 1
          %s234 = smul.addr %s233, 32
          %s235 = scalar_lea.vmem [#allocation6], %s234
          %s236 = smul.u32 8, %s25
          %s238 = ssub.s32 512, 512
          %239 = vsyncadd %s232, %s238
          %s240 = smul.addr %s236, 64
          %s241 = scalar_lea.hbm %s1, %s240
          %s243 = sshll.u32 %s235, 4
          %s244 = int_to_ptr.vmem [resolvable:$true] %s243
          %246 = dma.hbm_to_vmem [thread:$0]  %s241, 512, %s244, %s232
        $region28: #{tpu_custom_call.1} parent=23 // pred_fallthru
          _
        // Predicated region
        $region29: #{tpu_custom_call.1} parent=23 // pred_check
          %p247 = pneg %p92
        $region30: #{tpu_custom_call.1} parent=23 // pred_check_branch
          %249 = sbr.rel (%p247) target = $region32
        $region31: #{tpu_custom_call.1} parent=23 // pred_region
          %s250 = sand.u32 %s25, 1
          %s251 = scalar_lea.sflag [#allocation8], %s250
          %s252 = sand.u32 %s82, 1
          %s253 = smul.addr %s252, 32
          %s254 = scalar_lea.vmem [#allocation7], %s253
          %s255 = smul.u32 8, %s25
          %s257 = ssub.s32 512, 512
          %258 = vsyncadd %s251, %s257
          %s259 = smul.addr %s255, 64
          %s260 = scalar_lea.hbm %s2, %s259
          %s262 = sshll.u32 %s254, 4
          %s263 = int_to_ptr.vmem [resolvable:$true] %s262
          %265 = dma.hbm_to_vmem [thread:$0]  %s260, 512, %s263, %s251
        $region32: #{tpu_custom_call.1} parent=23 // pred_fallthru
          _
        // Predicated region
        $region33: #{tpu_custom_call.1} parent=23 // pred_check
          %p266 = pneg %p118
        $region34: #{tpu_custom_call.1} parent=23 // pred_check_branch
          %268 = sbr.rel (%p266) target = $region36
        $region35: #{tpu_custom_call.1} parent=23 // pred_region
          %s269 = sand.u32 %s25, 1
          %s270 = scalar_lea.sflag [#allocation8], %s269
          %s271 = sand.u32 %s108, 1
          %s272 = smul.addr %s271, 16
          %s273 = scalar_lea.vmem [#allocation9], %s272
          %s274 = smul.u32 8, %s25
          %s276 = ssub.s32 256, 256
          %277 = vsyncadd %s270, %s276
          %s278 = smul.addr %s274, 32
          %s279 = scalar_lea.hbm %s3, %s278
          %s281 = sshll.u32 %s273, 4
          %s282 = int_to_ptr.vmem [resolvable:$true] %s281
          %284 = dma.hbm_to_vmem [thread:$0]  %s279, 256, %s282, %s270
        $region36: #{tpu_custom_call.1} parent=23 // pred_fallthru
          _
        // Predicated region
        $region37: #{tpu_custom_call.1} parent=23 // pred_check
          %p285 = pneg %p144
        $region38: #{tpu_custom_call.1} parent=23 // pred_check_branch
          %287 = sbr.rel (%p285) target = $region40
        $region39: #{tpu_custom_call.1} parent=23 // pred_region
          %s288 = sand.u32 %s134, 1
          %s289 = scalar_lea.sflag [#allocation11], %s288
          %s290 = sand.u32 %s134, 1
          %s291 = smul.addr %s290, 16
          %s292 = scalar_lea.vmem [#allocation10], %s291
          %s293 = smul.u32 8, %s25
          %s295 = ssub.s32 256, 256
          %296 = vsyncadd %s289, %s295
          %s297 = smul.addr %s293, 32
          %s298 = scalar_lea.hbm %s4, %s297
          %s300 = sshll.u32 %s292, 4
          %s301 = int_to_ptr.vmem [resolvable:$true] %s300
          %303 = dma.hbm_to_vmem [thread:$0]  %s298, 256, %s301, %s289
        $region40: #{tpu_custom_call.1} parent=23 // pred_fallthru
          _
      $region24: #{tpu_custom_call.1} parent=5 // pred_fallthru
        _
      %p304 = scmp.le.s32.totalorder 1, %s25
      %p305 = scmp.lt.s32.totalorder %s25, 3
      %p306 = pnand %p304, %p305
      %p307 = pneg %p306
      // Predicated region
      $region41: #{tpu_custom_call.1} parent=5 // pred_check
        _
      $region42: #{tpu_custom_call.1} parent=5 // pred_check_branch
        %309 = sbr.rel (%p306) target = $region44
      $region43: #{tpu_custom_call.1} parent=5 // pred_region
        %s310 = ssub.s32 %s25, 1
        // Predicated region
        $region45: #{tpu_custom_call.1} parent=43 // pred_check
          %p311 = pneg %p46
        $region46: #{tpu_custom_call.1} parent=43 // pred_check_branch
          %313 = sbr.rel (%p311) target = $region48
        $region47: #{tpu_custom_call.1} parent=43 // pred_region
          %314 = dma.done [#allocation5], 16
        $region48: #{tpu_custom_call.1} parent=43 // pred_fallthru
          _
        %s315 = sand.u32 %s59, 1
        %s316 = scalar_lea.sflag [#allocation3], %s315
        %s317 = sand.u32 %s59, 1
        %s318 = smul.addr %s317, 32
        %s319 = scalar_lea.vmem [#allocation6], %s318
        // Predicated region
        $region49: #{tpu_custom_call.1} parent=43 // pred_check
          %p320 = pneg %p72
        $region50: #{tpu_custom_call.1} parent=43 // pred_check_branch
          %322 = sbr.rel (%p320) target = $region52
        $region51: #{tpu_custom_call.1} parent=43 // pred_region
          %323 = dma.done %s316, 512
        $region52: #{tpu_custom_call.1} parent=43 // pred_fallthru
          _
        %s324 = sand.u32 %s30, 1
        %s325 = scalar_lea.sflag [#allocation8], %s324
        %s326 = sand.u32 %s85, 1
        %s327 = smul.addr %s326, 32
        %s328 = scalar_lea.vmem [#allocation7], %s327
        // Predicated region
        $region53: #{tpu_custom_call.1} parent=43 // pred_check
          %p329 = pneg %p98
        $region54: #{tpu_custom_call.1} parent=43 // pred_check_branch
          %331 = sbr.rel (%p329) target = $region56
        $region55: #{tpu_custom_call.1} parent=43 // pred_region
          %332 = dma.done %s325, 512
        $region56: #{tpu_custom_call.1} parent=43 // pred_fallthru
          _
        %s333 = sand.u32 %s30, 1
        %s334 = scalar_lea.sflag [#allocation8], %s333
        %s335 = sand.u32 %s111, 1
        %s336 = smul.addr %s335, 16
        %s337 = scalar_lea.vmem [#allocation9], %s336
        // Predicated region
        $region57: #{tpu_custom_call.1} parent=43 // pred_check
          %p338 = pneg %p124
        $region58: #{tpu_custom_call.1} parent=43 // pred_check_branch
          %340 = sbr.rel (%p338) target = $region60
        $region59: #{tpu_custom_call.1} parent=43 // pred_region
          %341 = dma.done %s334, 256
        $region60: #{tpu_custom_call.1} parent=43 // pred_fallthru
          _
        %s342 = sand.u32 %s137, 1
        %s343 = scalar_lea.sflag [#allocation11], %s342
        %s344 = sand.u32 %s137, 1
        %s345 = smul.addr %s344, 16
        %s346 = scalar_lea.vmem [#allocation10], %s345
        // Predicated region
        $region61: #{tpu_custom_call.1} parent=43 // pred_check
          %p347 = pneg %p150
        $region62: #{tpu_custom_call.1} parent=43 // pred_check_branch
          %349 = sbr.rel (%p347) target = $region64
        $region63: #{tpu_custom_call.1} parent=43 // pred_region
          %350 = dma.done %s343, 256
        $region64: #{tpu_custom_call.1} parent=43 // pred_fallthru
          _
        %351 = sfence
        %p352 = pneg %p46
        %p353 = pneg %p43
        %s354 = sand.u32 %s59, 1
        %s355 = scalar_lea.sflag [#allocation3], %s354
        %s356 = sand.u32 %s59, 1
        %s357 = smul.addr %s356, 32
        %s358 = scalar_lea.vmem [#allocation6], %s357
        %p359 = pneg %p72
        %p360 = pneg %p69
        %s361 = sand.u32 %s30, 1
        %s362 = scalar_lea.sflag [#allocation8], %s361
        %s363 = sand.u32 %s85, 1
        %s364 = smul.addr %s363, 32
        %s365 = scalar_lea.vmem [#allocation7], %s364
        %p366 = pneg %p98
        %p367 = pneg %p95
        %s368 = sand.u32 %s30, 1
        %s369 = scalar_lea.sflag [#allocation8], %s368
        %s370 = sand.u32 %s111, 1
        %s371 = smul.addr %s370, 16
        %s372 = scalar_lea.vmem [#allocation9], %s371
        %p373 = pneg %p124
        %p374 = pneg %p121
        %s375 = sand.u32 %s137, 1
        %s376 = scalar_lea.sflag [#allocation11], %s375
        %s377 = sand.u32 %s137, 1
        %s378 = smul.addr %s377, 16
        %s379 = scalar_lea.vmem [#allocation10], %s378
        %p380 = pneg %p150
        %p381 = pneg %p147
        %p382 = pneg %p171
        %p383 = pneg %p168
        %p384 = pneg %p197
        %p385 = pneg %p194
        %s386 = sand.u32 %s184, 1
        %s387 = scalar_lea.sflag [#allocation4], %s386
        %s388 = sand.u32 %s184, 1
        %s389 = smul.addr %s388, 8
        %s390 = scalar_lea.vmem [#allocation12], %s389
        %s391 = smul.u32 8, %s30
        %s392 = smul.u32 8, %s30
        %s393 = smul.u32 8, %s30
        %s394 = smul.u32 8, %s30
        %s395 = smul.u32 8, %s30
        %v396 = vld [vmem:[%s319] ss:$4 sm:$0xff]
        %v397 = vld [vmem:[%s328] ss:$4 sm:$0xff]
        %v398 = vsub.f32 %v396, %v397
        %v399 = vmul.f32 %v398, %v398
        %s400 = sld [smem:[#allocation2]]
        %s401 = ssub.f32 0.0, %s400
        %v402 = vstv %s401
        %v403 = vmul.f32 %v399, %v402
        %s404 = scalar_lea.vmem %s319, 1 [#allocation6]
        %v405 = vld [vmem:[%s404] ss:$4 sm:$0xff]
        %s406 = scalar_lea.vmem %s328, 1 [#allocation7]
        %v407 = vld [vmem:[%s406] ss:$4 sm:$0xff]
        %v408 = vsub.f32 %v405, %v407
        %v409 = vmul.f32 %v408, %v408
        %s410 = sld [smem:[#allocation2 + $0x1]]
        %v411 = vstv %s410
        %v412 = vmul.f32 %v409, %v411
        %v413 = vsub.f32 %v403, %v412
        %s414 = scalar_lea.vmem %s319, 2 [#allocation6]
        %v415 = vld [vmem:[%s414] ss:$4 sm:$0xff]
        %s416 = scalar_lea.vmem %s328, 2 [#allocation7]
        %v417 = vld [vmem:[%s416] ss:$4 sm:$0xff]
        %v418 = vsub.f32 %v415, %v417
        %v419 = vmul.f32 %v418, %v418
        %s420 = sld [smem:[#allocation2 + $0x2]]
        %v421 = vstv %s420
        %v422 = vmul.f32 %v419, %v421
        %v423 = vsub.f32 %v413, %v422
        %v424 = vld [vmem:[%s337] sm:$0xff]
        %v425 = vld [vmem:[%s337 + $0x8] sm:$0xff]
        %v426 = vmul.u32 %v424, 8
        %v427 = vmul.u32 %v425, 8
        %v428 = vld [vmem:[%s346] sm:$0xff]
        %v429 = vld [vmem:[%s346 + $0x8] sm:$0xff]
        %v430 = vadd.s32 %v426, %v428
        %v431 = vadd.s32 %v427, %v429
        %v432 = vlaneseq
        %v433 = vshrl.u32 %v432, 7
        %v434 = vadd.s32 %v433, 8
        %v435 = vadd.s32 %v433, 16
        %v436 = vadd.s32 %v433, 24
        %v437 = vadd.s32 %v433, 32
        %v438 = vadd.s32 %v433, 40
        %v439 = vadd.s32 %v433, 48
        %v440 = vadd.s32 %v433, 56
        %v441 = vadd.s32 %v433, 64
        %v442 = vadd.s32 %v433, 72
        %v443 = vadd.s32 %v433, 80
        %v444 = vadd.s32 %v433, 88
        %v445 = vadd.s32 %v433, 96
        %v446 = vadd.s32 %v433, 104
        %v447 = vadd.s32 %v433, 112
        %v448 = vadd.s32 %v433, 120
        %v449 = vlaneseq
        %v450 = vshrl.u32 %v449, 7
        %v451 = vsub.s32 0, %v450
        %v452 = vrot.slane %v430, %v451
        %v453 = vlaneseq
        %v454 = vshrl.u32 %v453, 7
        %v455 = vsub.s32 2, %v454
        %v456 = vrot.slane %v430, %v455
        %v457 = vlaneseq
        %v458 = vshrl.u32 %v457, 7
        %v459 = vsub.s32 4, %v458
        %v460 = vrot.slane %v430, %v459
        %v461 = vlaneseq
        %v462 = vshrl.u32 %v461, 7
        %v463 = vsub.s32 6, %v462
        %v464 = vrot.slane %v430, %v463
        %v465 = vlaneseq
        %v466 = vshrl.u32 %v465, 7
        %v467 = vsub.s32 0, %v466
        %v468 = vrot.slane %v431, %v467
        %v469 = vlaneseq
        %v470 = vshrl.u32 %v469, 7
        %v471 = vsub.s32 2, %v470
        %v472 = vrot.slane %v431, %v471
        %v473 = vlaneseq
        %v474 = vshrl.u32 %v473, 7
        %v475 = vsub.s32 4, %v474
        %v476 = vrot.slane %v431, %v475
        %v477 = vlaneseq
        %v478 = vshrl.u32 %v477, 7
        %v479 = vsub.s32 6, %v478
        %v480 = vrot.slane %v431, %v479
        %v481 = vlaneseq
        %v482 = vshrl.u32 %v481, 7
        %v483 = vsub.s32 0, %v482
        %v484 = vrot.slane %v452, %v483
        %v485 = vlaneseq
        %v486 = vshrl.u32 %v485, 7
        %v487 = vsub.s32 0, %v486
        %v488 = vrot.slane %v456, %v487
        %v489 = vlaneseq
        %v490 = vshrl.u32 %v489, 7
        %v491 = vsub.s32 0, %v490
        %v492 = vrot.slane %v460, %v491
        %v493 = vlaneseq
        %v494 = vshrl.u32 %v493, 7
        %v495 = vsub.s32 0, %v494
        %v496 = vrot.slane %v464, %v495
        %v497 = vlaneseq
        %v498 = vshrl.u32 %v497, 7
        %v499 = vsub.s32 0, %v498
        %v500 = vrot.slane %v468, %v499
        %v501 = vlaneseq
        %v502 = vshrl.u32 %v501, 7
        %v503 = vsub.s32 0, %v502
        %v504 = vrot.slane %v472, %v503
        %v505 = vlaneseq
        %v506 = vshrl.u32 %v505, 7
        %v507 = vsub.s32 0, %v506
        %v508 = vrot.slane %v476, %v507
        %v509 = vlaneseq
        %v510 = vshrl.u32 %v509, 7
        %v511 = vsub.s32 0, %v510
        %v512 = vrot.slane %v480, %v511
        %vm513 = vcmp.eq.s32.totalorder %v433, %v484
        %vm514 = vcmp.eq.s32.totalorder %v433, %v488
        %vm515 = vcmp.eq.s32.totalorder %v433, %v492
        %vm516 = vcmp.eq.s32.totalorder %v433, %v496
        %vm517 = vcmp.eq.s32.totalorder %v433, %v500
        %vm518 = vcmp.eq.s32.totalorder %v433, %v504
        %vm519 = vcmp.eq.s32.totalorder %v433, %v508
        %vm520 = vcmp.eq.s32.totalorder %v433, %v512
        %vm521 = vcmp.eq.s32.totalorder %v434, %v484
        %vm522 = vcmp.eq.s32.totalorder %v434, %v488
        %vm523 = vcmp.eq.s32.totalorder %v434, %v492
        %vm524 = vcmp.eq.s32.totalorder %v434, %v496
        %vm525 = vcmp.eq.s32.totalorder %v434, %v500
        %vm526 = vcmp.eq.s32.totalorder %v434, %v504
        %vm527 = vcmp.eq.s32.totalorder %v434, %v508
        %vm528 = vcmp.eq.s32.totalorder %v434, %v512
        %vm529 = vcmp.eq.s32.totalorder %v435, %v484
        %vm530 = vcmp.eq.s32.totalorder %v435, %v488
        %vm531 = vcmp.eq.s32.totalorder %v435, %v492
        %vm532 = vcmp.eq.s32.totalorder %v435, %v496
        %vm533 = vcmp.eq.s32.totalorder %v435, %v500
        %vm534 = vcmp.eq.s32.totalorder %v435, %v504
        %vm535 = vcmp.eq.s32.totalorder %v435, %v508
        %vm536 = vcmp.eq.s32.totalorder %v435, %v512
        %vm537 = vcmp.eq.s32.totalorder %v436, %v484
        %vm538 = vcmp.eq.s32.totalorder %v436, %v488
        %vm539 = vcmp.eq.s32.totalorder %v436, %v492
        %vm540 = vcmp.eq.s32.totalorder %v436, %v496
        %vm541 = vcmp.eq.s32.totalorder %v436, %v500
        %vm542 = vcmp.eq.s32.totalorder %v436, %v504
        %vm543 = vcmp.eq.s32.totalorder %v436, %v508
        %vm544 = vcmp.eq.s32.totalorder %v436, %v512
        %vm545 = vcmp.eq.s32.totalorder %v437, %v484
        %vm546 = vcmp.eq.s32.totalorder %v437, %v488
        %vm547 = vcmp.eq.s32.totalorder %v437, %v492
        %vm548 = vcmp.eq.s32.totalorder %v437, %v496
        %vm549 = vcmp.eq.s32.totalorder %v437, %v500
        %vm550 = vcmp.eq.s32.totalorder %v437, %v504
        %vm551 = vcmp.eq.s32.totalorder %v437, %v508
        %vm552 = vcmp.eq.s32.totalorder %v437, %v512
        %vm553 = vcmp.eq.s32.totalorder %v438, %v484
        %vm554 = vcmp.eq.s32.totalorder %v438, %v488
        %vm555 = vcmp.eq.s32.totalorder %v438, %v492
        %vm556 = vcmp.eq.s32.totalorder %v438, %v496
        %vm557 = vcmp.eq.s32.totalorder %v438, %v500
        %vm558 = vcmp.eq.s32.totalorder %v438, %v504
        %vm559 = vcmp.eq.s32.totalorder %v438, %v508
        %vm560 = vcmp.eq.s32.totalorder %v438, %v512
        %vm561 = vcmp.eq.s32.totalorder %v439, %v484
        %vm562 = vcmp.eq.s32.totalorder %v439, %v488
        %vm563 = vcmp.eq.s32.totalorder %v439, %v492
        %vm564 = vcmp.eq.s32.totalorder %v439, %v496
        %vm565 = vcmp.eq.s32.totalorder %v439, %v500
        %vm566 = vcmp.eq.s32.totalorder %v439, %v504
        %vm567 = vcmp.eq.s32.totalorder %v439, %v508
        %vm568 = vcmp.eq.s32.totalorder %v439, %v512
        %vm569 = vcmp.eq.s32.totalorder %v440, %v484
        %vm570 = vcmp.eq.s32.totalorder %v440, %v488
        %vm571 = vcmp.eq.s32.totalorder %v440, %v492
        %vm572 = vcmp.eq.s32.totalorder %v440, %v496
        %vm573 = vcmp.eq.s32.totalorder %v440, %v500
        %vm574 = vcmp.eq.s32.totalorder %v440, %v504
        %vm575 = vcmp.eq.s32.totalorder %v440, %v508
        %vm576 = vcmp.eq.s32.totalorder %v440, %v512
        %vm577 = vcmp.eq.s32.totalorder %v441, %v484
        %vm578 = vcmp.eq.s32.totalorder %v441, %v488
        %vm579 = vcmp.eq.s32.totalorder %v441, %v492
        %vm580 = vcmp.eq.s32.totalorder %v441, %v496
        %vm581 = vcmp.eq.s32.totalorder %v441, %v500
        %vm582 = vcmp.eq.s32.totalorder %v441, %v504
        %vm583 = vcmp.eq.s32.totalorder %v441, %v508
        %vm584 = vcmp.eq.s32.totalorder %v441, %v512
        %vm585 = vcmp.eq.s32.totalorder %v442, %v484
        %vm586 = vcmp.eq.s32.totalorder %v442, %v488
        %vm587 = vcmp.eq.s32.totalorder %v442, %v492
        %vm588 = vcmp.eq.s32.totalorder %v442, %v496
        %vm589 = vcmp.eq.s32.totalorder %v442, %v500
        %vm590 = vcmp.eq.s32.totalorder %v442, %v504
        %vm591 = vcmp.eq.s32.totalorder %v442, %v508
        %vm592 = vcmp.eq.s32.totalorder %v442, %v512
        %vm593 = vcmp.eq.s32.totalorder %v443, %v484
        %vm594 = vcmp.eq.s32.totalorder %v443, %v488
        %vm595 = vcmp.eq.s32.totalorder %v443, %v492
        %vm596 = vcmp.eq.s32.totalorder %v443, %v496
        %vm597 = vcmp.eq.s32.totalorder %v443, %v500
        %vm598 = vcmp.eq.s32.totalorder %v443, %v504
        %vm599 = vcmp.eq.s32.totalorder %v443, %v508
        %vm600 = vcmp.eq.s32.totalorder %v443, %v512
        %vm601 = vcmp.eq.s32.totalorder %v444, %v484
        %vm602 = vcmp.eq.s32.totalorder %v444, %v488
        %vm603 = vcmp.eq.s32.totalorder %v444, %v492
        %vm604 = vcmp.eq.s32.totalorder %v444, %v496
        %vm605 = vcmp.eq.s32.totalorder %v444, %v500
        %vm606 = vcmp.eq.s32.totalorder %v444, %v504
        %vm607 = vcmp.eq.s32.totalorder %v444, %v508
        %vm608 = vcmp.eq.s32.totalorder %v444, %v512
        %vm609 = vcmp.eq.s32.totalorder %v445, %v484
        %vm610 = vcmp.eq.s32.totalorder %v445, %v488
        %vm611 = vcmp.eq.s32.totalorder %v445, %v492
        %vm612 = vcmp.eq.s32.totalorder %v445, %v496
        %vm613 = vcmp.eq.s32.totalorder %v445, %v500
        %vm614 = vcmp.eq.s32.totalorder %v445, %v504
        %vm615 = vcmp.eq.s32.totalorder %v445, %v508
        %vm616 = vcmp.eq.s32.totalorder %v445, %v512
        %vm617 = vcmp.eq.s32.totalorder %v446, %v484
        %vm618 = vcmp.eq.s32.totalorder %v446, %v488
        %vm619 = vcmp.eq.s32.totalorder %v446, %v492
        %vm620 = vcmp.eq.s32.totalorder %v446, %v496
        %vm621 = vcmp.eq.s32.totalorder %v446, %v500
        %vm622 = vcmp.eq.s32.totalorder %v446, %v504
        %vm623 = vcmp.eq.s32.totalorder %v446, %v508
        %vm624 = vcmp.eq.s32.totalorder %v446, %v512
        %vm625 = vcmp.eq.s32.totalorder %v447, %v484
        %vm626 = vcmp.eq.s32.totalorder %v447, %v488
        %vm627 = vcmp.eq.s32.totalorder %v447, %v492
        %vm628 = vcmp.eq.s32.totalorder %v447, %v496
        %vm629 = vcmp.eq.s32.totalorder %v447, %v500
        %vm630 = vcmp.eq.s32.totalorder %v447, %v504
        %vm631 = vcmp.eq.s32.totalorder %v447, %v508
        %vm632 = vcmp.eq.s32.totalorder %v447, %v512
        %vm633 = vcmp.eq.s32.totalorder %v448, %v484
        %vm634 = vcmp.eq.s32.totalorder %v448, %v488
        %vm635 = vcmp.eq.s32.totalorder %v448, %v492
        %vm636 = vcmp.eq.s32.totalorder %v448, %v496
        %vm637 = vcmp.eq.s32.totalorder %v448, %v500
        %vm638 = vcmp.eq.s32.totalorder %v448, %v504
        %vm639 = vcmp.eq.s32.totalorder %v448, %v508
        %vm640 = vcmp.eq.s32.totalorder %v448, %v512
        %v641 = vadd.s32 %v430, 64
        %v642 = vadd.s32 %v431, 64
        %v643 = vlaneseq
        %v644 = vshrl.u32 %v643, 7
        %v645 = vsub.s32 1, %v644
        %v646 = vrot.slane %v641, %v645
        %v647 = vlaneseq
        %v648 = vshrl.u32 %v647, 7
        %v649 = vsub.s32 3, %v648
        %v650 = vrot.slane %v641, %v649
        %v651 = vlaneseq
        %v652 = vshrl.u32 %v651, 7
        %v653 = vsub.s32 5, %v652
        %v654 = vrot.slane %v641, %v653
        %v655 = vlaneseq
        %v656 = vshrl.u32 %v655, 7
        %v657 = vsub.s32 7, %v656
        %v658 = vrot.slane %v641, %v657
        %v659 = vlaneseq
        %v660 = vshrl.u32 %v659, 7
        %v661 = vsub.s32 1, %v660
        %v662 = vrot.slane %v642, %v661
        %v663 = vlaneseq
        %v664 = vshrl.u32 %v663, 7
        %v665 = vsub.s32 3, %v664
        %v666 = vrot.slane %v642, %v665
        %v667 = vlaneseq
        %v668 = vshrl.u32 %v667, 7
        %v669 = vsub.s32 5, %v668
        %v670 = vrot.slane %v642, %v669
        %v671 = vlaneseq
        %v672 = vshrl.u32 %v671, 7
        %v673 = vsub.s32 7, %v672
        %v674 = vrot.slane %v642, %v673
        %v675 = vlaneseq
        %v676 = vshrl.u32 %v675, 7
        %v677 = vsub.s32 1, %v676
        %v678 = vrot.slane %v646, %v677
        %v679 = vlaneseq
        %v680 = vshrl.u32 %v679, 7
        %v681 = vsub.s32 1, %v680
        %v682 = vrot.slane %v650, %v681
        %v683 = vlaneseq
        %v684 = vshrl.u32 %v683, 7
        %v685 = vsub.s32 1, %v684
        %v686 = vrot.slane %v654, %v685
        %v687 = vlaneseq
        %v688 = vshrl.u32 %v687, 7
        %v689 = vsub.s32 1, %v688
        %v690 = vrot.slane %v658, %v689
        %v691 = vlaneseq
        %v692 = vshrl.u32 %v691, 7
        %v693 = vsub.s32 1, %v692
        %v694 = vrot.slane %v662, %v693
        %v695 = vlaneseq
        %v696 = vshrl.u32 %v695, 7
        %v697 = vsub.s32 1, %v696
        %v698 = vrot.slane %v666, %v697
        %v699 = vlaneseq
        %v700 = vshrl.u32 %v699, 7
        %v701 = vsub.s32 1, %v700
        %v702 = vrot.slane %v670, %v701
        %v703 = vlaneseq
        %v704 = vshrl.u32 %v703, 7
        %v705 = vsub.s32 1, %v704
        %v706 = vrot.slane %v674, %v705
        %vm707 = vcmp.eq.s32.totalorder %v433, %v678
        %vm708 = vcmp.eq.s32.totalorder %v433, %v682
        %vm709 = vcmp.eq.s32.totalorder %v433, %v686
        %vm710 = vcmp.eq.s32.totalorder %v433, %v690
        %vm711 = vcmp.eq.s32.totalorder %v433, %v694
        %vm712 = vcmp.eq.s32.totalorder %v433, %v698
        %vm713 = vcmp.eq.s32.totalorder %v433, %v702
        %vm714 = vcmp.eq.s32.totalorder %v433, %v706
        %vm715 = vcmp.eq.s32.totalorder %v434, %v678
        %vm716 = vcmp.eq.s32.totalorder %v434, %v682
        %vm717 = vcmp.eq.s32.totalorder %v434, %v686
        %vm718 = vcmp.eq.s32.totalorder %v434, %v690
        %vm719 = vcmp.eq.s32.totalorder %v434, %v694
        %vm720 = vcmp.eq.s32.totalorder %v434, %v698
        %vm721 = vcmp.eq.s32.totalorder %v434, %v702
        %vm722 = vcmp.eq.s32.totalorder %v434, %v706
        %vm723 = vcmp.eq.s32.totalorder %v435, %v678
        %vm724 = vcmp.eq.s32.totalorder %v435, %v682
        %vm725 = vcmp.eq.s32.totalorder %v435, %v686
        %vm726 = vcmp.eq.s32.totalorder %v435, %v690
        %vm727 = vcmp.eq.s32.totalorder %v435, %v694
        %vm728 = vcmp.eq.s32.totalorder %v435, %v698
        %vm729 = vcmp.eq.s32.totalorder %v435, %v702
        %vm730 = vcmp.eq.s32.totalorder %v435, %v706
        %vm731 = vcmp.eq.s32.totalorder %v436, %v678
        %vm732 = vcmp.eq.s32.totalorder %v436, %v682
        %vm733 = vcmp.eq.s32.totalorder %v436, %v686
        %vm734 = vcmp.eq.s32.totalorder %v436, %v690
        %vm735 = vcmp.eq.s32.totalorder %v436, %v694
        %vm736 = vcmp.eq.s32.totalorder %v436, %v698
        %vm737 = vcmp.eq.s32.totalorder %v436, %v702
        %vm738 = vcmp.eq.s32.totalorder %v436, %v706
        %vm739 = vcmp.eq.s32.totalorder %v437, %v678
        %vm740 = vcmp.eq.s32.totalorder %v437, %v682
        %vm741 = vcmp.eq.s32.totalorder %v437, %v686
        %vm742 = vcmp.eq.s32.totalorder %v437, %v690
        %vm743 = vcmp.eq.s32.totalorder %v437, %v694
        %vm744 = vcmp.eq.s32.totalorder %v437, %v698
        %vm745 = vcmp.eq.s32.totalorder %v437, %v702
        %vm746 = vcmp.eq.s32.totalorder %v437, %v706
        %vm747 = vcmp.eq.s32.totalorder %v438, %v678
        %vm748 = vcmp.eq.s32.totalorder %v438, %v682
        %vm749 = vcmp.eq.s32.totalorder %v438, %v686
        %vm750 = vcmp.eq.s32.totalorder %v438, %v690
        %vm751 = vcmp.eq.s32.totalorder %v438, %v694
        %vm752 = vcmp.eq.s32.totalorder %v438, %v698
        %vm753 = vcmp.eq.s32.totalorder %v438, %v702
        %vm754 = vcmp.eq.s32.totalorder %v438, %v706
        %vm755 = vcmp.eq.s32.totalorder %v439, %v678
        %vm756 = vcmp.eq.s32.totalorder %v439, %v682
        %vm757 = vcmp.eq.s32.totalorder %v439, %v686
        %vm758 = vcmp.eq.s32.totalorder %v439, %v690
        %vm759 = vcmp.eq.s32.totalorder %v439, %v694
        %vm760 = vcmp.eq.s32.totalorder %v439, %v698
        %vm761 = vcmp.eq.s32.totalorder %v439, %v702
        %vm762 = vcmp.eq.s32.totalorder %v439, %v706
        %vm763 = vcmp.eq.s32.totalorder %v440, %v678
        %vm764 = vcmp.eq.s32.totalorder %v440, %v682
        %vm765 = vcmp.eq.s32.totalorder %v440, %v686
        %vm766 = vcmp.eq.s32.totalorder %v440, %v690
        %vm767 = vcmp.eq.s32.totalorder %v440, %v694
        %vm768 = vcmp.eq.s32.totalorder %v440, %v698
        %vm769 = vcmp.eq.s32.totalorder %v440, %v702
        %vm770 = vcmp.eq.s32.totalorder %v440, %v706
        %vm771 = vcmp.eq.s32.totalorder %v441, %v678
        %vm772 = vcmp.eq.s32.totalorder %v441, %v682
        %vm773 = vcmp.eq.s32.totalorder %v441, %v686
        %vm774 = vcmp.eq.s32.totalorder %v441, %v690
        %vm775 = vcmp.eq.s32.totalorder %v441, %v694
        %vm776 = vcmp.eq.s32.totalorder %v441, %v698
        %vm777 = vcmp.eq.s32.totalorder %v441, %v702
        %vm778 = vcmp.eq.s32.totalorder %v441, %v706
        %vm779 = vcmp.eq.s32.totalorder %v442, %v678
        %vm780 = vcmp.eq.s32.totalorder %v442, %v682
        %vm781 = vcmp.eq.s32.totalorder %v442, %v686
        %vm782 = vcmp.eq.s32.totalorder %v442, %v690
        %vm783 = vcmp.eq.s32.totalorder %v442, %v694
        %vm784 = vcmp.eq.s32.totalorder %v442, %v698
        %vm785 = vcmp.eq.s32.totalorder %v442, %v702
        %vm786 = vcmp.eq.s32.totalorder %v442, %v706
        %vm787 = vcmp.eq.s32.totalorder %v443, %v678
        %vm788 = vcmp.eq.s32.totalorder %v443, %v682
        %vm789 = vcmp.eq.s32.totalorder %v443, %v686
        %vm790 = vcmp.eq.s32.totalorder %v443, %v690
        %vm791 = vcmp.eq.s32.totalorder %v443, %v694
        %vm792 = vcmp.eq.s32.totalorder %v443, %v698
        %vm793 = vcmp.eq.s32.totalorder %v443, %v702
        %vm794 = vcmp.eq.s32.totalorder %v443, %v706
        %vm795 = vcmp.eq.s32.totalorder %v444, %v678
        %vm796 = vcmp.eq.s32.totalorder %v444, %v682
        %vm797 = vcmp.eq.s32.totalorder %v444, %v686
        %vm798 = vcmp.eq.s32.totalorder %v444, %v690
        %vm799 = vcmp.eq.s32.totalorder %v444, %v694
        %vm800 = vcmp.eq.s32.totalorder %v444, %v698
        %vm801 = vcmp.eq.s32.totalorder %v444, %v702
        %vm802 = vcmp.eq.s32.totalorder %v444, %v706
        %vm803 = vcmp.eq.s32.totalorder %v445, %v678
        %vm804 = vcmp.eq.s32.totalorder %v445, %v682
        %vm805 = vcmp.eq.s32.totalorder %v445, %v686
        %vm806 = vcmp.eq.s32.totalorder %v445, %v690
        %vm807 = vcmp.eq.s32.totalorder %v445, %v694
        %vm808 = vcmp.eq.s32.totalorder %v445, %v698
        %vm809 = vcmp.eq.s32.totalorder %v445, %v702
        %vm810 = vcmp.eq.s32.totalorder %v445, %v706
        %vm811 = vcmp.eq.s32.totalorder %v446, %v678
        %vm812 = vcmp.eq.s32.totalorder %v446, %v682
        %vm813 = vcmp.eq.s32.totalorder %v446, %v686
        %vm814 = vcmp.eq.s32.totalorder %v446, %v690
        %vm815 = vcmp.eq.s32.totalorder %v446, %v694
        %vm816 = vcmp.eq.s32.totalorder %v446, %v698
        %vm817 = vcmp.eq.s32.totalorder %v446, %v702
        %vm818 = vcmp.eq.s32.totalorder %v446, %v706
        %vm819 = vcmp.eq.s32.totalorder %v447, %v678
        %vm820 = vcmp.eq.s32.totalorder %v447, %v682
        %vm821 = vcmp.eq.s32.totalorder %v447, %v686
        %vm822 = vcmp.eq.s32.totalorder %v447, %v690
        %vm823 = vcmp.eq.s32.totalorder %v447, %v694
        %vm824 = vcmp.eq.s32.totalorder %v447, %v698
        %vm825 = vcmp.eq.s32.totalorder %v447, %v702
        %vm826 = vcmp.eq.s32.totalorder %v447, %v706
        %vm827 = vcmp.eq.s32.totalorder %v448, %v678
        %vm828 = vcmp.eq.s32.totalorder %v448, %v682
        %vm829 = vcmp.eq.s32.totalorder %v448, %v686
        %vm830 = vcmp.eq.s32.totalorder %v448, %v690
        %vm831 = vcmp.eq.s32.totalorder %v448, %v694
        %vm832 = vcmp.eq.s32.totalorder %v448, %v698
        %vm833 = vcmp.eq.s32.totalorder %v448, %v702
        %vm834 = vcmp.eq.s32.totalorder %v448, %v706
        %vm835 = vmor %vm513, %vm707
        %vm836 = vmor %vm514, %vm708
        %vm837 = vmor %vm515, %vm709
        %vm838 = vmor %vm516, %vm710
        %vm839 = vmor %vm517, %vm711
        %vm840 = vmor %vm518, %vm712
        %vm841 = vmor %vm519, %vm713
        %vm842 = vmor %vm520, %vm714
        %vm843 = vmor %vm521, %vm715
        %vm844 = vmor %vm522, %vm716
        %vm845 = vmor %vm523, %vm717
        %vm846 = vmor %vm524, %vm718
        %vm847 = vmor %vm525, %vm719
        %vm848 = vmor %vm526, %vm720
        %vm849 = vmor %vm527, %vm721
        %vm850 = vmor %vm528, %vm722
        %vm851 = vmor %vm529, %vm723
        %vm852 = vmor %vm530, %vm724
        %vm853 = vmor %vm531, %vm725
        %vm854 = vmor %vm532, %vm726
        %vm855 = vmor %vm533, %vm727
        %vm856 = vmor %vm534, %vm728
        %vm857 = vmor %vm535, %vm729
        %vm858 = vmor %vm536, %vm730
        %vm859 = vmor %vm537, %vm731
        %vm860 = vmor %vm538, %vm732
        %vm861 = vmor %vm539, %vm733
        %vm862 = vmor %vm540, %vm734
        %vm863 = vmor %vm541, %vm735
        %vm864 = vmor %vm542, %vm736
        %vm865 = vmor %vm543, %vm737
        %vm866 = vmor %vm544, %vm738
        %vm867 = vmor %vm545, %vm739
        %vm868 = vmor %vm546, %vm740
        %vm869 = vmor %vm547, %vm741
        %vm870 = vmor %vm548, %vm742
        %vm871 = vmor %vm549, %vm743
        %vm872 = vmor %vm550, %vm744
        %vm873 = vmor %vm551, %vm745
        %vm874 = vmor %vm552, %vm746
        %vm875 = vmor %vm553, %vm747
        %vm876 = vmor %vm554, %vm748
        %vm877 = vmor %vm555, %vm749
        %vm878 = vmor %vm556, %vm750
        %vm879 = vmor %vm557, %vm751
        %vm880 = vmor %vm558, %vm752
        %vm881 = vmor %vm559, %vm753
        %vm882 = vmor %vm560, %vm754
        %vm883 = vmor %vm561, %vm755
        %vm884 = vmor %vm562, %vm756
        %vm885 = vmor %vm563, %vm757
        %vm886 = vmor %vm564, %vm758
        %vm887 = vmor %vm565, %vm759
        %vm888 = vmor %vm566, %vm760
        %vm889 = vmor %vm567, %vm761
        %vm890 = vmor %vm568, %vm762
        %vm891 = vmor %vm569, %vm763
        %vm892 = vmor %vm570, %vm764
        %vm893 = vmor %vm571, %vm765
        %vm894 = vmor %vm572, %vm766
        %vm895 = vmor %vm573, %vm767
        %vm896 = vmor %vm574, %vm768
        %vm897 = vmor %vm575, %vm769
        %vm898 = vmor %vm576, %vm770
        %vm899 = vmor %vm577, %vm771
        %vm900 = vmor %vm578, %vm772
        %vm901 = vmor %vm579, %vm773
        %vm902 = vmor %vm580, %vm774
        %vm903 = vmor %vm581, %vm775
        %vm904 = vmor %vm582, %vm776
        %vm905 = vmor %vm583, %vm777
        %vm906 = vmor %vm584, %vm778
        %vm907 = vmor %vm585, %vm779
        %vm908 = vmor %vm586, %vm780
        %vm909 = vmor %vm587, %vm781
        %vm910 = vmor %vm588, %vm782
        %vm911 = vmor %vm589, %vm783
        %vm912 = vmor %vm590, %vm784
        %vm913 = vmor %vm591, %vm785
        %vm914 = vmor %vm592, %vm786
        %vm915 = vmor %vm593, %vm787
        %vm916 = vmor %vm594, %vm788
        %vm917 = vmor %vm595, %vm789
        %vm918 = vmor %vm596, %vm790
        %vm919 = vmor %vm597, %vm791
        %vm920 = vmor %vm598, %vm792
        %vm921 = vmor %vm599, %vm793
        %vm922 = vmor %vm600, %vm794
        %vm923 = vmor %vm601, %vm795
        %vm924 = vmor %vm602, %vm796
        %vm925 = vmor %vm603, %vm797
        %vm926 = vmor %vm604, %vm798
        %vm927 = vmor %vm605, %vm799
        %vm928 = vmor %vm606, %vm800
        %vm929 = vmor %vm607, %vm801
        %vm930 = vmor %vm608, %vm802
        %vm931 = vmor %vm609, %vm803
        %vm932 = vmor %vm610, %vm804
        %vm933 = vmor %vm611, %vm805
        %vm934 = vmor %vm612, %vm806
        %vm935 = vmor %vm613, %vm807
        %vm936 = vmor %vm614, %vm808
        %vm937 = vmor %vm615, %vm809
        %vm938 = vmor %vm616, %vm810
        %vm939 = vmor %vm617, %vm811
        %vm940 = vmor %vm618, %vm812
        %vm941 = vmor %vm619, %vm813
        %vm942 = vmor %vm620, %vm814
        %vm943 = vmor %vm621, %vm815
        %vm944 = vmor %vm622, %vm816
        %vm945 = vmor %vm623, %vm817
        %vm946 = vmor %vm624, %vm818
        %vm947 = vmor %vm625, %vm819
        %vm948 = vmor %vm626, %vm820
        %vm949 = vmor %vm627, %vm821
        %vm950 = vmor %vm628, %vm822
        %vm951 = vmor %vm629, %vm823
        %vm952 = vmor %vm630, %vm824
        %vm953 = vmor %vm631, %vm825
        %vm954 = vmor %vm632, %vm826
        %vm955 = vmor %vm633, %vm827
        %vm956 = vmor %vm634, %vm828
        %vm957 = vmor %vm635, %vm829
        %vm958 = vmor %vm636, %vm830
        %vm959 = vmor %vm637, %vm831
        %vm960 = vmor %vm638, %vm832
        %vm961 = vmor %vm639, %vm833
        %vm962 = vmor %vm640, %vm834
        %v963 = vsel %vm835, 1, 0
        %v964 = vsel %vm836, 1, 0
        %v965 = vsel %vm837, 1, 0
        %v966 = vsel %vm838, 1, 0
        %v967 = vsel %vm839, 1, 0
        %v968 = vsel %vm840, 1, 0
        %v969 = vsel %vm841, 1, 0
        %v970 = vsel %vm842, 1, 0
        %v971 = vsel %vm843, 1, 0
        %v972 = vsel %vm844, 1, 0
        %v973 = vsel %vm845, 1, 0
        %v974 = vsel %vm846, 1, 0
        %v975 = vsel %vm847, 1, 0
        %v976 = vsel %vm848, 1, 0
        %v977 = vsel %vm849, 1, 0
        %v978 = vsel %vm850, 1, 0
        %v979 = vsel %vm851, 1, 0
        %v980 = vsel %vm852, 1, 0
        %v981 = vsel %vm853, 1, 0
        %v982 = vsel %vm854, 1, 0
        %v983 = vsel %vm855, 1, 0
        %v984 = vsel %vm856, 1, 0
        %v985 = vsel %vm857, 1, 0
        %v986 = vsel %vm858, 1, 0
        %v987 = vsel %vm859, 1, 0
        %v988 = vsel %vm860, 1, 0
        %v989 = vsel %vm861, 1, 0
        %v990 = vsel %vm862, 1, 0
        %v991 = vsel %vm863, 1, 0
        %v992 = vsel %vm864, 1, 0
        %v993 = vsel %vm865, 1, 0
        %v994 = vsel %vm866, 1, 0
        %v995 = vsel %vm867, 1, 0
        %v996 = vsel %vm868, 1, 0
        %v997 = vsel %vm869, 1, 0
        %v998 = vsel %vm870, 1, 0
        %v999 = vsel %vm871, 1, 0
        %v1000 = vsel %vm872, 1, 0
        %v1001 = vsel %vm873, 1, 0
        %v1002 = vsel %vm874, 1, 0
        %v1003 = vsel %vm875, 1, 0
        %v1004 = vsel %vm876, 1, 0
        %v1005 = vsel %vm877, 1, 0
        %v1006 = vsel %vm878, 1, 0
        %v1007 = vsel %vm879, 1, 0
        %v1008 = vsel %vm880, 1, 0
        %v1009 = vsel %vm881, 1, 0
        %v1010 = vsel %vm882, 1, 0
        %v1011 = vsel %vm883, 1, 0
        %v1012 = vsel %vm884, 1, 0
        %v1013 = vsel %vm885, 1, 0
        %v1014 = vsel %vm886, 1, 0
        %v1015 = vsel %vm887, 1, 0
        %v1016 = vsel %vm888, 1, 0
        %v1017 = vsel %vm889, 1, 0
        %v1018 = vsel %vm890, 1, 0
        %v1019 = vsel %vm891, 1, 0
        %v1020 = vsel %vm892, 1, 0
        %v1021 = vsel %vm893, 1, 0
        %v1022 = vsel %vm894, 1, 0
        %v1023 = vsel %vm895, 1, 0
        %v1024 = vsel %vm896, 1, 0
        %v1025 = vsel %vm897, 1, 0
        %v1026 = vsel %vm898, 1, 0
        %v1027 = vsel %vm899, 1, 0
        %v1028 = vsel %vm900, 1, 0
        %v1029 = vsel %vm901, 1, 0
        %v1030 = vsel %vm902, 1, 0
        %v1031 = vsel %vm903, 1, 0
        %v1032 = vsel %vm904, 1, 0
        %v1033 = vsel %vm905, 1, 0
        %v1034 = vsel %vm906, 1, 0
        %v1035 = vsel %vm907, 1, 0
        %v1036 = vsel %vm908, 1, 0
        %v1037 = vsel %vm909, 1, 0
        %v1038 = vsel %vm910, 1, 0
        %v1039 = vsel %vm911, 1, 0
        %v1040 = vsel %vm912, 1, 0
        %v1041 = vsel %vm913, 1, 0
        %v1042 = vsel %vm914, 1, 0
        %v1043 = vsel %vm915, 1, 0
        %v1044 = vsel %vm916, 1, 0
        %v1045 = vsel %vm917, 1, 0
        %v1046 = vsel %vm918, 1, 0
        %v1047 = vsel %vm919, 1, 0
        %v1048 = vsel %vm920, 1, 0
        %v1049 = vsel %vm921, 1, 0
        %v1050 = vsel %vm922, 1, 0
        %v1051 = vsel %vm923, 1, 0
        %v1052 = vsel %vm924, 1, 0
        %v1053 = vsel %vm925, 1, 0
        %v1054 = vsel %vm926, 1, 0
        %v1055 = vsel %vm927, 1, 0
        %v1056 = vsel %vm928, 1, 0
        %v1057 = vsel %vm929, 1, 0
        %v1058 = vsel %vm930, 1, 0
        %v1059 = vsel %vm931, 1, 0
        %v1060 = vsel %vm932, 1, 0
        %v1061 = vsel %vm933, 1, 0
        %v1062 = vsel %vm934, 1, 0
        %v1063 = vsel %vm935, 1, 0
        %v1064 = vsel %vm936, 1, 0
        %v1065 = vsel %vm937, 1, 0
        %v1066 = vsel %vm938, 1, 0
        %v1067 = vsel %vm939, 1, 0
        %v1068 = vsel %vm940, 1, 0
        %v1069 = vsel %vm941, 1, 0
        %v1070 = vsel %vm942, 1, 0
        %v1071 = vsel %vm943, 1, 0
        %v1072 = vsel %vm944, 1, 0
        %v1073 = vsel %vm945, 1, 0
        %v1074 = vsel %vm946, 1, 0
        %v1075 = vsel %vm947, 1, 0
        %v1076 = vsel %vm948, 1, 0
        %v1077 = vsel %vm949, 1, 0
        %v1078 = vsel %vm950, 1, 0
        %v1079 = vsel %vm951, 1, 0
        %v1080 = vsel %vm952, 1, 0
        %v1081 = vsel %vm953, 1, 0
        %v1082 = vsel %vm954, 1, 0
        %v1083 = vsel %vm955, 1, 0
        %v1084 = vsel %vm956, 1, 0
        %v1085 = vsel %vm957, 1, 0
        %v1086 = vsel %vm958, 1, 0
        %v1087 = vsel %vm959, 1, 0
        %v1088 = vsel %vm960, 1, 0
        %v1089 = vsel %vm961, 1, 0
        %v1090 = vsel %vm962, 1, 0
        %v1091 = vcvt.s32.f32 %v963
        %v1092 = vcvt.s32.f32 %v964
        %v1093 = vcvt.s32.f32 %v965
        %v1094 = vcvt.s32.f32 %v966
        %v1095 = vcvt.s32.f32 %v967
        %v1096 = vcvt.s32.f32 %v968
        %v1097 = vcvt.s32.f32 %v969
        %v1098 = vcvt.s32.f32 %v970
        %v1099 = vcvt.s32.f32 %v971
        %v1100 = vcvt.s32.f32 %v972
        %v1101 = vcvt.s32.f32 %v973
        %v1102 = vcvt.s32.f32 %v974
        %v1103 = vcvt.s32.f32 %v975
        %v1104 = vcvt.s32.f32 %v976
        %v1105 = vcvt.s32.f32 %v977
        %v1106 = vcvt.s32.f32 %v978
        %v1107 = vcvt.s32.f32 %v979
        %v1108 = vcvt.s32.f32 %v980
        %v1109 = vcvt.s32.f32 %v981
        %v1110 = vcvt.s32.f32 %v982
        %v1111 = vcvt.s32.f32 %v983
        %v1112 = vcvt.s32.f32 %v984
        %v1113 = vcvt.s32.f32 %v985
        %v1114 = vcvt.s32.f32 %v986
        %v1115 = vcvt.s32.f32 %v987
        %v1116 = vcvt.s32.f32 %v988
        %v1117 = vcvt.s32.f32 %v989
        %v1118 = vcvt.s32.f32 %v990
        %v1119 = vcvt.s32.f32 %v991
        %v1120 = vcvt.s32.f32 %v992
        %v1121 = vcvt.s32.f32 %v993
        %v1122 = vcvt.s32.f32 %v994
        %v1123 = vcvt.s32.f32 %v995
        %v1124 = vcvt.s32.f32 %v996
        %v1125 = vcvt.s32.f32 %v997
        %v1126 = vcvt.s32.f32 %v998
        %v1127 = vcvt.s32.f32 %v999
        %v1128 = vcvt.s32.f32 %v1000
        %v1129 = vcvt.s32.f32 %v1001
        %v1130 = vcvt.s32.f32 %v1002
        %v1131 = vcvt.s32.f32 %v1003
        %v1132 = vcvt.s32.f32 %v1004
        %v1133 = vcvt.s32.f32 %v1005
        %v1134 = vcvt.s32.f32 %v1006
        %v1135 = vcvt.s32.f32 %v1007
        %v1136 = vcvt.s32.f32 %v1008
        %v1137 = vcvt.s32.f32 %v1009
        %v1138 = vcvt.s32.f32 %v1010
        %v1139 = vcvt.s32.f32 %v1011
        %v1140 = vcvt.s32.f32 %v1012
        %v1141 = vcvt.s32.f32 %v1013
        %v1142 = vcvt.s32.f32 %v1014
        %v1143 = vcvt.s32.f32 %v1015
        %v1144 = vcvt.s32.f32 %v1016
        %v1145 = vcvt.s32.f32 %v1017
        %v1146 = vcvt.s32.f32 %v1018
        %v1147 = vcvt.s32.f32 %v1019
        %v1148 = vcvt.s32.f32 %v1020
        %v1149 = vcvt.s32.f32 %v1021
        %v1150 = vcvt.s32.f32 %v1022
        %v1151 = vcvt.s32.f32 %v1023
        %v1152 = vcvt.s32.f32 %v1024
        %v1153 = vcvt.s32.f32 %v1025
        %v1154 = vcvt.s32.f32 %v1026
        %v1155 = vcvt.s32.f32 %v1027
        %v1156 = vcvt.s32.f32 %v1028
        %v1157 = vcvt.s32.f32 %v1029
        %v1158 = vcvt.s32.f32 %v1030
        %v1159 = vcvt.s32.f32 %v1031
        %v1160 = vcvt.s32.f32 %v1032
        %v1161 = vcvt.s32.f32 %v1033
        %v1162 = vcvt.s32.f32 %v1034
        %v1163 = vcvt.s32.f32 %v1035
        %v1164 = vcvt.s32.f32 %v1036
        %v1165 = vcvt.s32.f32 %v1037
        %v1166 = vcvt.s32.f32 %v1038
        %v1167 = vcvt.s32.f32 %v1039
        %v1168 = vcvt.s32.f32 %v1040
        %v1169 = vcvt.s32.f32 %v1041
        %v1170 = vcvt.s32.f32 %v1042
        %v1171 = vcvt.s32.f32 %v1043
        %v1172 = vcvt.s32.f32 %v1044
        %v1173 = vcvt.s32.f32 %v1045
        %v1174 = vcvt.s32.f32 %v1046
        %v1175 = vcvt.s32.f32 %v1047
        %v1176 = vcvt.s32.f32 %v1048
        %v1177 = vcvt.s32.f32 %v1049
        %v1178 = vcvt.s32.f32 %v1050
        %v1179 = vcvt.s32.f32 %v1051
        %v1180 = vcvt.s32.f32 %v1052
        %v1181 = vcvt.s32.f32 %v1053
        %v1182 = vcvt.s32.f32 %v1054
        %v1183 = vcvt.s32.f32 %v1055
        %v1184 = vcvt.s32.f32 %v1056
        %v1185 = vcvt.s32.f32 %v1057
        %v1186 = vcvt.s32.f32 %v1058
        %v1187 = vcvt.s32.f32 %v1059
        %v1188 = vcvt.s32.f32 %v1060
        %v1189 = vcvt.s32.f32 %v1061
        %v1190 = vcvt.s32.f32 %v1062
        %v1191 = vcvt.s32.f32 %v1063
        %v1192 = vcvt.s32.f32 %v1064
        %v1193 = vcvt.s32.f32 %v1065
        %v1194 = vcvt.s32.f32 %v1066
        %v1195 = vcvt.s32.f32 %v1067
        %v1196 = vcvt.s32.f32 %v1068
        %v1197 = vcvt.s32.f32 %v1069
        %v1198 = vcvt.s32.f32 %v1070
        %v1199 = vcvt.s32.f32 %v1071
        %v1200 = vcvt.s32.f32 %v1072
        %v1201 = vcvt.s32.f32 %v1073
        %v1202 = vcvt.s32.f32 %v1074
        %v1203 = vcvt.s32.f32 %v1075
        %v1204 = vcvt.s32.f32 %v1076
        %v1205 = vcvt.s32.f32 %v1077
        %v1206 = vcvt.s32.f32 %v1078
        %v1207 = vcvt.s32.f32 %v1079
        %v1208 = vcvt.s32.f32 %v1080
        %v1209 = vcvt.s32.f32 %v1081
        %v1210 = vcvt.s32.f32 %v1082
        %v1211 = vcvt.s32.f32 %v1083
        %v1212 = vcvt.s32.f32 %v1084
        %v1213 = vcvt.s32.f32 %v1085
        %v1214 = vcvt.s32.f32 %v1086
        %v1215 = vcvt.s32.f32 %v1087
        %v1216 = vcvt.s32.f32 %v1088
        %v1217 = vcvt.s32.f32 %v1089
        %v1218 = vcvt.s32.f32 %v1090
        %v1219 = vld [vmem:[%s5] sm:$0xff]
        %1220 = vmatprep.subr.mxu0 %v1212
        %1221 = vmatpush1.msra.mxu0 %v1211
        %1222 = vmatprep.subr.mxu0 %v1204
        %1223 = vmatpush1.msra.mxu0 %v1203
        %1224 = vmatprep.subr.mxu0 %v1196
        %1225 = vmatpush1.msra.mxu0 %v1195
        %1226 = vmatprep.subr.mxu0 %v1188
        %1227 = vmatpush1.msra.mxu0 %v1187
        %1228 = vmatprep.subr.mxu0 %v1180
        %1229 = vmatpush1.msra.mxu0 %v1179
        %1230 = vmatprep.subr.mxu0 %v1172
        %1231 = vmatpush1.msra.mxu0 %v1171
        %1232 = vmatprep.subr.mxu0 %v1164
        %1233 = vmatpush1.msra.mxu0 %v1163
        %1234 = vmatprep.subr.mxu0 %v1156
        %1235 = vmatpush1.msra.mxu0 %v1155
        %1236 = vmatprep.subr.mxu0 %v1148
        %1237 = vmatpush1.msra.mxu0 %v1147
        %1238 = vmatprep.subr.mxu0 %v1140
        %1239 = vmatpush1.msra.mxu0 %v1139
        %1240 = vmatprep.subr.mxu0 %v1132
        %1241 = vmatpush1.msra.mxu0 %v1131
        %1242 = vmatprep.subr.mxu0 %v1124
        %1243 = vmatpush1.msra.mxu0 %v1123
        %1244 = vmatprep.subr.mxu0 %v1116
        %1245 = vmatpush1.msra.mxu0 %v1115
        %1246 = vmatprep.subr.mxu0 %v1108
        %1247 = vmatpush1.msra.mxu0 %v1107
        %1248 = vmatprep.subr.mxu0 %v1100
        %1249 = vmatpush1.msra.mxu0 %v1099
        %1250 = vmatprep.subr.mxu0 %v1092
        %1251 = vmatpush1.msra.mxu0 %v1091
        %1252 = vmatprep.subr.mxu0 0.0
        %1253 = vmatpush2.msra.mxu0 0.0
        %1254 = vmatprep.subr.mxu0 0.0
        %1255 = vmatpush2.msra.mxu0 0.0
        %1256 = vmatprep.subr.mxu0 0.0
        %1257 = vmatpush2.msra.mxu0 0.0
        %1258 = vmatprep.subr.mxu0 0.0
        %1259 = vmatpush2.msra.mxu0 0.0
        %1260 = vmatprep.subr.mxu0 0.0
        %1261 = vmatpush2.msra.mxu0 0.0
        %1262 = vmatprep.subr.mxu0 0.0
        %1263 = vmatpush2.msra.mxu0 0.0
        %1264 = vmatprep.subr.mxu0 0.0
        %1265 = vmatpush2.msra.mxu0 0.0
        %1266 = vmatprep.subr.mxu0 0.0
        %1267 = vmatpush2.msra.mxu0 0.0
        %1268 = vmatprep.subr.mxu0 0.0
        %1269 = vmatpush2.msra.mxu0 0.0
        %1270 = vmatprep.subr.mxu0 0.0
        %1271 = vmatpush2.msra.mxu0 0.0
        %1272 = vmatprep.subr.mxu0 0.0
        %1273 = vmatpush2.msra.mxu0 0.0
        %1274 = vmatprep.subr.mxu0 0.0
        %1275 = vmatpush2.msra.mxu0 0.0
        %1276 = vmatprep.subr.mxu0 0.0
        %1277 = vmatpush2.msra.mxu0 0.0
        %1278 = vmatprep.subr.mxu0 0.0
        %1279 = vmatpush2.msra.mxu0 0.0
        %1280 = vmatprep.subr.mxu0 0.0
        %1281 = vmatpush2.msra.mxu0 0.0
        %1282 = vmatprep.subr.mxu0 0.0
        %1283 = vmatpush2.msra.mxu0 0.0
        %1284 = vmatprep.mubr.f32.mxu0 0.0
        %1285 = vmatmul.mubr.f32.gmra.mxu0 %v1219
        %v1286 = vpop.f32.mrf.mxu0
        %v1287 = vadd.f32 0.0, %v1286
        %v1288 = vpop.f32.mrf.mxu0
        %v1289 = vadd.f32 0.0, %v1288
        %1290 = vdwg.mxu0
        %1291 = vmatprep.subr.mxu0 %v1214
        %1292 = vmatpush1.msra.mxu0 %v1213
        %1293 = vmatprep.subr.mxu0 %v1206
        %1294 = vmatpush1.msra.mxu0 %v1205
        %1295 = vmatprep.subr.mxu0 %v1198
        %1296 = vmatpush1.msra.mxu0 %v1197
        %1297 = vmatprep.subr.mxu0 %v1190
        %1298 = vmatpush1.msra.mxu0 %v1189
        %1299 = vmatprep.subr.mxu0 %v1182
        %1300 = vmatpush1.msra.mxu0 %v1181
        %1301 = vmatprep.subr.mxu0 %v1174
        %1302 = vmatpush1.msra.mxu0 %v1173
        %1303 = vmatprep.subr.mxu0 %v1166
        %1304 = vmatpush1.msra.mxu0 %v1165
        %1305 = vmatprep.subr.mxu0 %v1158
        %1306 = vmatpush1.msra.mxu0 %v1157
        %1307 = vmatprep.subr.mxu0 %v1150
        %1308 = vmatpush1.msra.mxu0 %v1149
        %1309 = vmatprep.subr.mxu0 %v1142
        %1310 = vmatpush1.msra.mxu0 %v1141
        %1311 = vmatprep.subr.mxu0 %v1134
        %1312 = vmatpush1.msra.mxu0 %v1133
        %1313 = vmatprep.subr.mxu0 %v1126
        %1314 = vmatpush1.msra.mxu0 %v1125
        %1315 = vmatprep.subr.mxu0 %v1118
        %1316 = vmatpush1.msra.mxu0 %v1117
        %1317 = vmatprep.subr.mxu0 %v1110
        %1318 = vmatpush1.msra.mxu0 %v1109
        %1319 = vmatprep.subr.mxu0 %v1102
        %1320 = vmatpush1.msra.mxu0 %v1101
        %1321 = vmatprep.subr.mxu0 %v1094
        %1322 = vmatpush1.msra.mxu0 %v1093
        %1323 = vmatprep.subr.mxu0 0.0
        %1324 = vmatpush2.msra.mxu0 0.0
        %1325 = vmatprep.subr.mxu0 0.0
        %1326 = vmatpush2.msra.mxu0 0.0
        %1327 = vmatprep.subr.mxu0 0.0
        %1328 = vmatpush2.msra.mxu0 0.0
        %1329 = vmatprep.subr.mxu0 0.0
        %1330 = vmatpush2.msra.mxu0 0.0
        %1331 = vmatprep.subr.mxu0 0.0
        %1332 = vmatpush2.msra.mxu0 0.0
        %1333 = vmatprep.subr.mxu0 0.0
        %1334 = vmatpush2.msra.mxu0 0.0
        %1335 = vmatprep.subr.mxu0 0.0
        %1336 = vmatpush2.msra.mxu0 0.0
        %1337 = vmatprep.subr.mxu0 0.0
        %1338 = vmatpush2.msra.mxu0 0.0
        %1339 = vmatprep.subr.mxu0 0.0
        %1340 = vmatpush2.msra.mxu0 0.0
        %1341 = vmatprep.subr.mxu0 0.0
        %1342 = vmatpush2.msra.mxu0 0.0
        %1343 = vmatprep.subr.mxu0 0.0
        %1344 = vmatpush2.msra.mxu0 0.0
        %1345 = vmatprep.subr.mxu0 0.0
        %1346 = vmatpush2.msra.mxu0 0.0
        %1347 = vmatprep.subr.mxu0 0.0
        %1348 = vmatpush2.msra.mxu0 0.0
        %1349 = vmatprep.subr.mxu0 0.0
        %1350 = vmatpush2.msra.mxu0 0.0
        %1351 = vmatprep.subr.mxu0 0.0
        %1352 = vmatpush2.msra.mxu0 0.0
        %1353 = vmatprep.subr.mxu0 0.0
        %1354 = vmatpush2.msra.mxu0 0.0
        %1355 = vmatprep.mubr.f32.mxu0 0.0
        %1356 = vmatmul.mubr.f32.gmra.mxu0 %v1219
        %v1357 = vpop.f32.mrf.mxu0
        %v1358 = vadd.f32 0.0, %v1357
        %v1359 = vpop.f32.mrf.mxu0
        %v1360 = vadd.f32 0.0, %v1359
        %1361 = vdwg.mxu0
        %1362 = vmatprep.subr.mxu0 %v1216
        %1363 = vmatpush1.msra.mxu0 %v1215
        %1364 = vmatprep.subr.mxu0 %v1208
        %1365 = vmatpush1.msra.mxu0 %v1207
        %1366 = vmatprep.subr.mxu0 %v1200
        %1367 = vmatpush1.msra.mxu0 %v1199
        %1368 = vmatprep.subr.mxu0 %v1192
        %1369 = vmatpush1.msra.mxu0 %v1191
        %1370 = vmatprep.subr.mxu0 %v1184
        %1371 = vmatpush1.msra.mxu0 %v1183
        %1372 = vmatprep.subr.mxu0 %v1176
        %1373 = vmatpush1.msra.mxu0 %v1175
        %1374 = vmatprep.subr.mxu0 %v1168
        %1375 = vmatpush1.msra.mxu0 %v1167
        %1376 = vmatprep.subr.mxu0 %v1160
        %1377 = vmatpush1.msra.mxu0 %v1159
        %1378 = vmatprep.subr.mxu0 %v1152
        %1379 = vmatpush1.msra.mxu0 %v1151
        %1380 = vmatprep.subr.mxu0 %v1144
        %1381 = vmatpush1.msra.mxu0 %v1143
        %1382 = vmatprep.subr.mxu0 %v1136
        %1383 = vmatpush1.msra.mxu0 %v1135
        %1384 = vmatprep.subr.mxu0 %v1128
        %1385 = vmatpush1.msra.mxu0 %v1127
        %1386 = vmatprep.subr.mxu0 %v1120
        %1387 = vmatpush1.msra.mxu0 %v1119
        %1388 = vmatprep.subr.mxu0 %v1112
        %1389 = vmatpush1.msra.mxu0 %v1111
        %1390 = vmatprep.subr.mxu0 %v1104
        %1391 = vmatpush1.msra.mxu0 %v1103
        %1392 = vmatprep.subr.mxu0 %v1096
        %1393 = vmatpush1.msra.mxu0 %v1095
        %1394 = vmatprep.subr.mxu0 0.0
        %1395 = vmatpush2.msra.mxu0 0.0
        %1396 = vmatprep.subr.mxu0 0.0
        %1397 = vmatpush2.msra.mxu0 0.0
        %1398 = vmatprep.subr.mxu0 0.0
        %1399 = vmatpush2.msra.mxu0 0.0
        %1400 = vmatprep.subr.mxu0 0.0
        %1401 = vmatpush2.msra.mxu0 0.0
        %1402 = vmatprep.subr.mxu0 0.0
        %1403 = vmatpush2.msra.mxu0 0.0
        %1404 = vmatprep.subr.mxu0 0.0
        %1405 = vmatpush2.msra.mxu0 0.0
        %1406 = vmatprep.subr.mxu0 0.0
        %1407 = vmatpush2.msra.mxu0 0.0
        %1408 = vmatprep.subr.mxu0 0.0
        %1409 = vmatpush2.msra.mxu0 0.0
        %1410 = vmatprep.subr.mxu0 0.0
        %1411 = vmatpush2.msra.mxu0 0.0
        %1412 = vmatprep.subr.mxu0 0.0
        %1413 = vmatpush2.msra.mxu0 0.0
        %1414 = vmatprep.subr.mxu0 0.0
        %1415 = vmatpush2.msra.mxu0 0.0
        %1416 = vmatprep.subr.mxu0 0.0
        %1417 = vmatpush2.msra.mxu0 0.0
        %1418 = vmatprep.subr.mxu0 0.0
        %1419 = vmatpush2.msra.mxu0 0.0
        %1420 = vmatprep.subr.mxu0 0.0
        %1421 = vmatpush2.msra.mxu0 0.0
        %1422 = vmatprep.subr.mxu0 0.0
        %1423 = vmatpush2.msra.mxu0 0.0
        %1424 = vmatprep.subr.mxu0 0.0
        %1425 = vmatpush2.msra.mxu0 0.0
        %1426 = vmatprep.mubr.f32.mxu0 0.0
        %1427 = vmatmul.mubr.f32.gmra.mxu0 %v1219
        %v1428 = vpop.f32.mrf.mxu0
        %v1429 = vadd.f32 0.0, %v1428
        %v1430 = vpop.f32.mrf.mxu0
        %v1431 = vadd.f32 0.0, %v1430
        %1432 = vdwg.mxu0
        %1433 = vmatprep.subr.mxu0 %v1218
        %1434 = vmatpush1.msra.mxu0 %v1217
        %1435 = vmatprep.subr.mxu0 %v1210
        %1436 = vmatpush1.msra.mxu0 %v1209
        %1437 = vmatprep.subr.mxu0 %v1202
        %1438 = vmatpush1.msra.mxu0 %v1201
        %1439 = vmatprep.subr.mxu0 %v1194
        %1440 = vmatpush1.msra.mxu0 %v1193
        %1441 = vmatprep.subr.mxu0 %v1186
        %1442 = vmatpush1.msra.mxu0 %v1185
        %1443 = vmatprep.subr.mxu0 %v1178
        %1444 = vmatpush1.msra.mxu0 %v1177
        %1445 = vmatprep.subr.mxu0 %v1170
        %1446 = vmatpush1.msra.mxu0 %v1169
        %1447 = vmatprep.subr.mxu0 %v1162
        %1448 = vmatpush1.msra.mxu0 %v1161
        %1449 = vmatprep.subr.mxu0 %v1154
        %1450 = vmatpush1.msra.mxu0 %v1153
        %1451 = vmatprep.subr.mxu0 %v1146
        %1452 = vmatpush1.msra.mxu0 %v1145
        %1453 = vmatprep.subr.mxu0 %v1138
        %1454 = vmatpush1.msra.mxu0 %v1137
        %1455 = vmatprep.subr.mxu0 %v1130
        %1456 = vmatpush1.msra.mxu0 %v1129
        %1457 = vmatprep.subr.mxu0 %v1122
        %1458 = vmatpush1.msra.mxu0 %v1121
        %1459 = vmatprep.subr.mxu0 %v1114
        %1460 = vmatpush1.msra.mxu0 %v1113
        %1461 = vmatprep.subr.mxu0 %v1106
        %1462 = vmatpush1.msra.mxu0 %v1105
        %1463 = vmatprep.subr.mxu0 %v1098
        %1464 = vmatpush1.msra.mxu0 %v1097
        %1465 = vmatprep.subr.mxu0 0.0
        %1466 = vmatpush2.msra.mxu0 0.0
        %1467 = vmatprep.subr.mxu0 0.0
        %1468 = vmatpush2.msra.mxu0 0.0
        %1469 = vmatprep.subr.mxu0 0.0
        %1470 = vmatpush2.msra.mxu0 0.0
        %1471 = vmatprep.subr.mxu0 0.0
        %1472 = vmatpush2.msra.mxu0 0.0
        %1473 = vmatprep.subr.mxu0 0.0
        %1474 = vmatpush2.msra.mxu0 0.0
        %1475 = vmatprep.subr.mxu0 0.0
        %1476 = vmatpush2.msra.mxu0 0.0
        %1477 = vmatprep.subr.mxu0 0.0
        %1478 = vmatpush2.msra.mxu0 0.0
        %1479 = vmatprep.subr.mxu0 0.0
        %1480 = vmatpush2.msra.mxu0 0.0
        %1481 = vmatprep.subr.mxu0 0.0
        %1482 = vmatpush2.msra.mxu0 0.0
        %1483 = vmatprep.subr.mxu0 0.0
        %1484 = vmatpush2.msra.mxu0 0.0
        %1485 = vmatprep.subr.mxu0 0.0
        %1486 = vmatpush2.msra.mxu0 0.0
        %1487 = vmatprep.subr.mxu0 0.0
        %1488 = vmatpush2.msra.mxu0 0.0
        %1489 = vmatprep.subr.mxu0 0.0
        %1490 = vmatpush2.msra.mxu0 0.0
        %1491 = vmatprep.subr.mxu0 0.0
        %1492 = vmatpush2.msra.mxu0 0.0
        %1493 = vmatprep.subr.mxu0 0.0
        %1494 = vmatpush2.msra.mxu0 0.0
        %1495 = vmatprep.subr.mxu0 0.0
        %1496 = vmatpush2.msra.mxu0 0.0
        %1497 = vmatprep.mubr.f32.mxu0 0.0
        %1498 = vmatmul.mubr.f32.gmra.mxu0 %v1219
        %v1499 = vpop.f32.mrf.mxu0
        %v1500 = vadd.f32 0.0, %v1499
        %v1501 = vpop.f32.mrf.mxu0
        %v1502 = vadd.f32 0.0, %v1501
        %1503 = vdwg.mxu0
        %v1512 = vcombine.low %v1287, %v1289
        %v1513 = vcombine.low %v1358, %v1360
        %v1514 = vcombine.low %v1429, %v1431
        %v1515 = vcombine.low %v1500, %v1502
        %v1517 = vunpack.c.l.s4 1966171168
        %v1518 = vunpack.c.0.s8 %v1517
        %v1519 = vlaneseq
        %v1520 = vshrl.u32 %v1519, 7
        %v1521 = vsub.s32 %v1518, %v1520
        %v1522 = vrot.slane %v1512, %v1521
        %v1524 = vunpack.c.l.s4 1966171168
        %v1525 = vunpack.c.0.s8 %v1524
        %v1526 = vlaneseq
        %v1527 = vshrl.u32 %v1526, 7
        %v1528 = vsub.s32 %v1525, %v1527
        %v1529 = vrot.slane %v1513, %v1528
        %v1531 = vunpack.c.l.s4 1966171168
        %v1532 = vunpack.c.0.s8 %v1531
        %v1533 = vlaneseq
        %v1534 = vshrl.u32 %v1533, 7
        %v1535 = vsub.s32 %v1532, %v1534
        %v1536 = vrot.slane %v1514, %v1535
        %v1538 = vunpack.c.l.s4 1966171168
        %v1539 = vunpack.c.0.s8 %v1538
        %v1540 = vlaneseq
        %v1541 = vshrl.u32 %v1540, 7
        %v1542 = vsub.s32 %v1539, %v1541
        %v1543 = vrot.slane %v1515, %v1542
        %v1544 = vcombine.low %v1522, %v1529
        %v1545 = vcombine.low %v1536, %v1543
        %v1547 = vunpack.c.l.s4 1966171168
        %v1548 = vunpack.c.0.s8 %v1547
        %v1549 = vlaneseq
        %v1550 = vshrl.u32 %v1549, 7
        %v1551 = vsub.s32 %v1548, %v1550
        %v1552 = vrot.slane %v1544, %v1551
        %v1554 = vunpack.c.l.s4 1966171168
        %v1555 = vunpack.c.0.s8 %v1554
        %v1556 = vlaneseq
        %v1557 = vshrl.u32 %v1556, 7
        %v1558 = vsub.s32 %v1555, %v1557
        %v1559 = vrot.slane %v1545, %v1558
        %v1560 = vcombine.low %v1552, %v1559
        %v1562 = vadd.f32 %v423, %v1560
        %v1563 = vmul.f32 %v1562, 1.442695
        %v1564 = vpow.pop %v1563
        %1565 = vst [vmem:[%s390] sm:$0xff] %v1564
        %s1566 = sand.u32 %s184, 1
        %s1567 = scalar_lea.sflag [#allocation4], %s1566
        %s1568 = sand.u32 %s184, 1
        %s1569 = smul.addr %s1568, 8
        %s1570 = scalar_lea.vmem [#allocation12], %s1569
        // Predicated region
        $region65: #{tpu_custom_call.1} parent=43 // pred_check
          %p1571 = pneg %p194
        $region66: #{tpu_custom_call.1} parent=43 // pred_check_branch
          %1573 = sbr.rel (%p1571) target = $region68
        $region67: #{tpu_custom_call.1} parent=43 // pred_region
          %s1574 = smul.u32 8, %s30
          %s1576 = ssub.s32 128, 128
          %1577 = vsyncadd %s1567, %s1576
          %s1578 = smul.addr %s1574, 16
          %s1579 = scalar_lea.hbm %s6, %s1578
          %s1581 = sshll.u32 %s1570, 4
          %s1582 = int_to_ptr.vmem [resolvable:$true] %s1581
          %1584 = dma.vmem_to_hbm [thread:$0]  %s1582, 128, %s1579, %s1567
        $region68: #{tpu_custom_call.1} parent=43 // pred_fallthru
          _
      $region44: #{tpu_custom_call.1} parent=5 // pred_fallthru
        _
      %p1585 = scmp.le.s32.totalorder 2, %s25
      // Predicated region
      $region69: #{tpu_custom_call.1} parent=5 // pred_check
        %p1586 = pneg %p1585
      $region70: #{tpu_custom_call.1} parent=5 // pred_check_branch
        %1588 = sbr.rel (%p1586) target = $region72
      $region71: #{tpu_custom_call.1} parent=5 // pred_region
        %s1589 = ssub.s32 %s25, 2
        // Predicated region
        $region73: #{tpu_custom_call.1} parent=71 // pred_check
          %p1590 = pneg %p200
        $region74: #{tpu_custom_call.1} parent=71 // pred_check_branch
          %1592 = sbr.rel (%p1590) target = $region76
        $region75: #{tpu_custom_call.1} parent=71 // pred_region
          %s1593 = sand.u32 %s185, 1
          %s1594 = scalar_lea.sflag [#allocation4], %s1593
          %s1595 = sand.u32 %s185, 1
          %s1596 = smul.addr %s1595, 8
          %s1597 = scalar_lea.vmem [#allocation12], %s1596
          %1598 = dma.done %s1594, 128
        $region76: #{tpu_custom_call.1} parent=71 // pred_fallthru
          _
      $region72: #{tpu_custom_call.1} parent=5 // pred_fallthru
        _
    $region6: #{tpu_custom_call.1} parent=1 // loop_footer
      %s29 = sadd.s32 1, %s25
    $region7: #{tpu_custom_call.1} parent=1 // loop_footer_branch
      %24 = sbr.rel target = $region3
    $region8: #{tpu_custom_call.1} parent=1 // loop_exit
      _
    %1599 = vsyncpa [#allocation3], 1
    %s1600 = scalar_lea.sflag [#allocation3], 1
    %1601 = vsyncpa %s1600, 1
    %1602 = vsyncpa [#allocation8], 1
    %s1603 = scalar_lea.sflag [#allocation8], 1
    %1604 = vsyncpa %s1603, 1
    %1605 = vsyncpa [#allocation11], 1
    %s1606 = scalar_lea.sflag [#allocation11], 1
    %1607 = vsyncpa %s1606, 1
    %1608 = vsyncpa [#allocation4], 1
    %s1609 = scalar_lea.sflag [#allocation4], 1
    %1610 = vsyncpa %s1609, 1
    %1611 = vsyncpa [#allocation5], 1
    %s1612 = scalar_lea.sflag [#allocation5], 1
    %1613 = vsyncpa %s1612, 1

</llo_original>
